<compile_context>
chip_gen: v6e
topology: v6e:2x2x1
jax: 0.10.0
libtpu: 0.0.40
codegen_flags: <defaults>
</compile_context>

<pallas_src>
import functools

import numpy as np
import jax
import jax.numpy as jnp
from jax import lax
from jax.experimental import pallas as pl
from jax.experimental.pallas import tpu as pltpu


# ----------------------------- tile helpers --------------------------------

def _largest_divisor_leq(n, cap):
    for d in range(min(cap, n), 0, -1):
        if n % d == 0:
            return d
    return n


def _pick_tile(dim, unit, cap):
    """Largest multiple of `unit` that divides `dim` and is <= cap, else dim."""
    best = dim
    k = unit
    while k <= min(cap, dim):
        if dim % k == 0:
            best = k
        k += unit
    return best


# ----------------------- fused 2-layer LSTM kernel --------------------------

def _lstm2_kernel(x_ref, wih1_ref, whh1_ref, b1_ref,
                  wih2_ref, whh2_ref, b2_ref,
                  out_ref,
                  gx_buf, h1_buf, h1_c, c1_c, h2_c, c2_c, *, batch):
    """Two stacked LSTM layers over one time chunk (rows = tile_t * B).

    x_ref   : (tile_t*B, E)  time-major rows (row = t*B + b), compute dtype
    wih1_ref: (E, 4H)        layer-1 input->gates (pre-transposed)
    whh1_ref: (H, 4H)        layer-1 hidden->gates (pre-transposed)
    b1_ref  : (1, 4H)        layer-1 combined bias (f32)
    wih2_ref/whh2_ref/b2_ref : same for layer 2 (input dim = H)
    out_ref : (tile_t*B, H)  layer-2 hidden states (f32)
    gx_buf  : VMEM (tile_t*B, 4H) f32   hoisted input->gates (reused by L1/L2)
    h1_buf  : VMEM (tile_t*B, H)  f32   layer-1 outputs for this chunk
    h1_c/c1_c/h2_c/c2_c : VMEM (B, H) f32 recurrent state carried across chunks
    """
    rows, _ = x_ref.shape
    B = batch
    tile_t = rows // B
    H = whh1_ref.shape[0]

    # Zero-initialise recurrent state on the first time chunk only.
    @pl.when(pl.program_id(0) == 0)
    def _():
        h1_c[...] = jnp.zeros_like(h1_c)
        c1_c[...] = jnp.zeros_like(c1_c)
        h2_c[...] = jnp.zeros_like(h2_c)
        c2_c[...] = jnp.zeros_like(c2_c)

    def gate_math(gates, c):
        # PyTorch gate order i, f, g, o.  All elementwise math in f32.
        i = jax.nn.sigmoid(gates[:, 0 * H:1 * H])
        f = jax.nn.sigmoid(gates[:, 1 * H:2 * H])
        g = jnp.tanh(gates[:, 2 * H:3 * H])
        o = jax.nn.sigmoid(gates[:, 3 * H:4 * H])
        c_new = f * c + i * g
        h_new = o * jnp.tanh(c_new)
        return h_new, c_new

    # ---- layer 1: hoisted input->gates (one big MXU matmul, bias folded) ----
    gx_buf[...] = (jnp.dot(x_ref[...], wih1_ref[...],
                           preferred_element_type=jnp.float32)
                   + b1_ref[...])

    def step1(t, carry):
        h, c = carry
        r0 = pl.multiple_of(t * B, B)
        gates = (gx_buf[pl.ds(r0, B), :]
                 + jnp.dot(h.astype(whh1_ref.dtype), whh1_ref[...],
                           preferred_element_type=jnp.float32))
        h_new, c_new = gate_math(gates, c)
        h1_buf[pl.ds(r0, B), :] = h_new
        return (h_new, c_new)

    h1, c1 = lax.fori_loop(0, tile_t, step1, (h1_c[...], c1_c[...]),
                           unroll=True)
    h1_c[...] = h1
    c1_c[...] = c1

    # ---- layer 2: hoisted input->gates over the whole chunk -----------------
    gx_buf[...] = (jnp.dot(h1_buf[...].astype(wih2_ref.dtype), wih2_ref[...],
                           preferred_element_type=jnp.float32)
                   + b2_ref[...])

    def step2(t, carry):
        h, c = carry
        r0 = pl.multiple_of(t * B, B)
        gates = (gx_buf[pl.ds(r0, B), :]
                 + jnp.dot(h.astype(whh2_ref.dtype), whh2_ref[...],
                           preferred_element_type=jnp.float32))
        h_new, c_new = gate_math(gates, c)
        out_ref[pl.ds(r0, B), :] = h_new.astype(out_ref.dtype)
        return (h_new, c_new)

    h2, c2 = lax.fori_loop(0, tile_t, step2, (h2_c[...], c2_c[...]),
                           unroll=True)
    h2_c[...] = h2
    c2_c[...] = c2


def lstm2_stack(x_tm2d, batch, lstm1, lstm2, *, tile_t=None,
                compute_dtype=jnp.float32):
    """Fused 2-layer LSTM.  x_tm2d: (T*B, E) time-major rows -> (T*B, H) f32."""
    rows, E = x_tm2d.shape
    B = batch
    T = rows // B
    w_ih1, w_hh1, b1 = lstm1
    w_ih2, w_hh2, b2 = lstm2
    H = w_hh1.shape[1]

    if tile_t is None:
        tile_t = _largest_divisor_leq(T, 32)
    tile_t = min(tile_t, T)
    assert T % tile_t == 0, "tile_t must divide T"
    # Block second-to-last dim must be a multiple of 8 or the full extent.
    if (tile_t * B) % 8 != 0 and tile_t != T:
        tile_t = T

    cd = compute_dtype
    x_tm2d = x_tm2d.astype(cd)
    wih1_t = w_ih1.T.astype(cd)                     # (E, 4H)
    whh1_t = w_hh1.T.astype(cd)                     # (H, 4H)
    wih2_t = w_ih2.T.astype(cd)                     # (H, 4H)
    whh2_t = w_hh2.T.astype(cd)                     # (H, 4H)
    b1_2d = b1.reshape(1, -1).astype(jnp.float32)   # (1, 4H)
    b2_2d = b2.reshape(1, -1).astype(jnp.float32)

    grid = (T // tile_t,)
    w_full = lambda i: (0, 0)
    itemsize = jnp.dtype(cd).itemsize

    flops = 2 * T * B * 4 * H * (E + 3 * H)
    transcendentals = 10 * T * B * H
    bytes_accessed = (x_tm2d.size * itemsize + T * B * H * 4
                      + (wih1_t.size + whh1_t.size + wih2_t.size
                         + whh2_t.size) * itemsize
                      + (b1_2d.size + b2_2d.size) * 4)

    return pl.pallas_call(
        functools.partial(_lstm2_kernel, batch=B),
        out_shape=jax.ShapeDtypeStruct((T * B, H), jnp.float32),
        grid_spec=pltpu.PrefetchScalarGridSpec(
            num_scalar_prefetch=0,
            grid=grid,
            in_specs=[
                pl.BlockSpec((tile_t * B, E), lambda i: (i, 0)),
                pl.BlockSpec((E, 4 * H), w_full),
                pl.BlockSpec((H, 4 * H), w_full),
                pl.BlockSpec((1, 4 * H), w_full),
                pl.BlockSpec((H, 4 * H), w_full),
                pl.BlockSpec((H, 4 * H), w_full),
                pl.BlockSpec((1, 4 * H), w_full),
            ],
            out_specs=pl.BlockSpec((tile_t * B, H), lambda i: (i, 0)),
            scratch_shapes=[
                pltpu.VMEM((tile_t * B, 4 * H), jnp.float32),  # gx_buf
                pltpu.VMEM((tile_t * B, H), jnp.float32),      # h1_buf
                pltpu.VMEM((B, H), jnp.float32),               # h1 carry
                pltpu.VMEM((B, H), jnp.float32),               # c1 carry
                pltpu.VMEM((B, H), jnp.float32),               # h2 carry
                pltpu.VMEM((B, H), jnp.float32),               # c2 carry
            ]),
        compiler_params=pltpu.CompilerParams(
            dimension_semantics=("arbitrary",)),   # time chunks are sequential
        cost_estimate=pl.CostEstimate(flops=int(flops),
                                      transcendentals=int(transcendentals),
                                      bytes_accessed=int(bytes_accessed)),
    )(x_tm2d, wih1_t, whh1_t, b1_2d, wih2_t, whh2_t, b2_2d)


# --------------------------- tiled vocab projection --------------------------

def _linear_kernel(x_ref, w_ref, b_ref, out_ref):
    """out = x @ W_t + b  (W already pre-transposed to (H, V); no in-kernel .T)."""
    out_ref[...] = (jnp.dot(x_ref[...], w_ref[...],
                            preferred_element_type=jnp.float32)
                    + b_ref[...]).astype(out_ref.dtype)


def linear(x2d, w_t, b, *, tn=None, tv=None):
    """x2d: (N, H), w_t: (H, V) pre-transposed, b: (V,) -> (N, V) f32."""
    N, H = x2d.shape
    V = w_t.shape[1]
    x2d = x2d.astype(w_t.dtype)

    if tn is None:
        tn = _pick_tile(N, 8, 256)       # row tile (multiple of 8 or full N)
    if tv is None:
        tv = _pick_tile(V, 128, 2048)    # lane-dense vocab tile (mult of 128 or full V)
    assert N % tn == 0 and V % tv == 0

    itemsize = jnp.dtype(w_t.dtype).itemsize
    flops = 2 * N * H * V
    bytes_accessed = (x2d.size * itemsize + w_t.size * itemsize
                      + V * 4 + N * V * 4)

    return pl.pallas_call(
        _linear_kernel,
        out_shape=jax.ShapeDtypeStruct((N, V), jnp.float32),
        grid_spec=pltpu.PrefetchScalarGridSpec(
            num_scalar_prefetch=0,
            grid=(N // tn, V // tv),
            in_specs=[
                pl.BlockSpec((tn, H), lambda i, j: (i, 0)),
                pl.BlockSpec((H, tv), lambda i, j: (0, j)),
                pl.BlockSpec((1, tv), lambda i, j: (0, j)),
            ],
            out_specs=pl.BlockSpec((tn, tv), lambda i, j: (i, j))),
        compiler_params=pltpu.CompilerParams(
            dimension_semantics=("parallel", "parallel")),  # 2 TCs on v7x
        cost_estimate=pl.CostEstimate(flops=int(flops), transcendentals=0,
                                      bytes_accessed=int(bytes_accessed)),
    )(x2d, w_t, b.reshape(1, -1).astype(jnp.float32))


# ------------------------------- ELMo forward --------------------------------

def elmo_forward(params, X_forward, X_backward, *,
                 compute_dtype=jnp.float32, lstm_tile_t=None):
    cd = compute_dtype

    def branch(X, lstm1, lstm2, fc_w, fc_b):
        B, T = X.shape
        # TODO(synk): embedding gather is a tiny table lookup; kept in plain JAX.
        emb = params["embedding"][X]                      # (B, T, E)
        x_tm = jnp.transpose(emb, (1, 0, 2))              # (T, B, E) time-major
        x_rows = x_tm.reshape(T * B, emb.shape[-1])       # row = t*B + b
        h2 = lstm2_stack(x_rows, B, lstm1, lstm2,
                         tile_t=lstm_tile_t, compute_dtype=cd)   # (T*B, H) f32
        V = fc_w.shape[0]
        logits = linear(h2, fc_w.T.astype(cd), fc_b)      # (T*B, V) f32
        return jnp.transpose(logits.reshape(T, B, V), (1, 0, 2))  # (B, T, V)

    fwd = branch(X_forward, params["lstm_f1"], params["lstm_f2"],
                 params["fc_f_w"], params["fc_f_b"])
    bwd = branch(X_backward, params["lstm_b1"], params["lstm_b2"],
                 params["fc_b_w"], params["fc_b_b"])
    return fwd, bwd


# ----------------------------- pure-JAX reference ----------------------------

def _ref_lstm(x_bt, w_ih, w_hh, bias):
    B, T, _ = x_bt.shape
    H = w_hh.shape[1]

    def step(carry, x_t):
        h, c = carry
        gates = x_t @ w_ih.T + h @ w_hh.T + bias
        i, f, g, o = jnp.split(gates, 4, axis=-1)
        i, f, o = jax.nn.sigmoid(i), jax.nn.sigmoid(f), jax.nn.sigmoid(o)
        g = jnp.tanh(g)
        c = f * c + i * g
        h = o * jnp.tanh(c)
        return (h, c), h

    x_tm = jnp.transpose(x_bt, (1, 0, 2))
    (_, _), hs = lax.scan(step, (jnp.zeros((B, H), jnp.float32),
                                 jnp.zeros((B, H), jnp.float32)), x_tm)
    return jnp.transpose(hs, (1, 0, 2))


def _ref_forward(params, X_forward, X_backward):
    def branch(X, lstm1, lstm2, fc_w, fc_b):
        emb = params["embedding"][X]
        h1 = _ref_lstm(emb, *lstm1)
        h2 = _ref_lstm(h1, *lstm2)
        return h2 @ fc_w.T + fc_b

    return (branch(X_forward, params["lstm_f1"], params["lstm_f2"],
                   params["fc_f_w"], params["fc_f_b"]),
            branch(X_backward, params["lstm_b1"], params["lstm_b2"],
                   params["fc_b_w"], params["fc_b_b"]))


# ------------------------------- setup & main --------------------------------

def init_params(key, vocab_size, embedding_dim, hidden_dim):
    H = hidden_dim
    ks = jax.random.split(key, 18)
    s = 1.0 / np.sqrt(H)

    def u(k, shape):
        return jax.random.uniform(k, shape, jnp.float32, -s, s)

    def lstm_params(k0, k1, k2, in_dim):
        # combined bias = b_ih + b_hh (same semantics as PyTorch LSTM)
        return (u(k0, (4 * H, in_dim)), u(k1, (4 * H, H)), u(k2, (4 * H,)))

    return {
        "embedding": jax.random.normal(ks[0], (vocab_size, embedding_dim),
                                       jnp.float32),
        "lstm_f1": lstm_params(ks[1], ks[2], ks[3], embedding_dim),
        "lstm_f2": lstm_params(ks[4], ks[5], ks[6], hidden_dim),
        "lstm_b1": lstm_params(ks[7], ks[8], ks[9], embedding_dim),
        "lstm_b2": lstm_params(ks[10], ks[11], ks[12], hidden_dim),
        "fc_f_w": u(ks[13], (vocab_size, H)),
        "fc_f_b": u(ks[14], (vocab_size,)),
        "fc_b_w": u(ks[15], (vocab_size, H)),
        "fc_b_b": u(ks[16], (vocab_size,)),
    }


if __name__ == "__main__":
    vocab_size, embedding_dim, hidden_dim = 64, 32, 32
    batch, seq = 2, 8

    key = jax.random.PRNGKey(0)
    k_par, k_xf, k_xb = jax.random.split(key, 3)
    params = init_params(k_par, vocab_size, embedding_dim, hidden_dim)

    X_forward = jax.random.randint(k_xf, (batch, seq), 0, vocab_size,
                                   dtype=jnp.int32)
    X_backward = jax.random.randint(k_xb, (batch, seq), 0, vocab_size,
                                    dtype=jnp.int32)

    ref_f, ref_b = _ref_forward(params, X_forward, X_backward)

    # f32 MXU path, time chunked (tile_t=4 -> 2 grid steps: exercises the
    # recurrent h/c state carried in VMEM scratch across grid steps).
    fwd_out, bwd_out = jax.block_until_ready(
        elmo_forward(params, X_forward, X_backward,
                     compute_dtype=jnp.float32, lstm_tile_t=4))
    assert fwd_out.shape == (batch, seq, vocab_size)
    assert bwd_out.shape == (batch, seq, vocab_size)
    np.testing.assert_allclose(np.asarray(fwd_out), np.asarray(ref_f),
                               rtol=1e-4, atol=1e-4)
    np.testing.assert_allclose(np.asarray(bwd_out), np.asarray(ref_b),
                               rtol=1e-4, atol=1e-4)

    # bf16 MXU-operand path (f32 accumulate + f32 gate math); loose tolerance.
    fwd_bf, bwd_bf = jax.block_until_ready(
        elmo_forward(params, X_forward, X_backward,
                     compute_dtype=jnp.bfloat16, lstm_tile_t=4))
    np.testing.assert_allclose(np.asarray(fwd_bf), np.asarray(ref_f),
                               rtol=1e-1, atol=1e-1)
    np.testing.assert_allclose(np.asarray(bwd_bf), np.asarray(ref_b),
                               rtol=1e-1, atol=1e-1)

    # Explicitly exercise a multi-tile projection grid (rows split in 2 tiles).
    xs = jax.random.normal(jax.random.PRNGKey(1), (16, hidden_dim), jnp.float32)
    y_tiled = jax.block_until_ready(
        linear(xs, params["fc_f_w"].T, params["fc_f_b"], tn=8, tv=vocab_size))
    np.testing.assert_allclose(
        np.asarray(y_tiled),
        np.asarray(xs @ params["fc_f_w"].T + params["fc_f_b"]),
        rtol=1e-4, atol=1e-4)

    print("KERNEL_OK")
</pallas_src>

<mosaic_0001>
module attributes {stable_mosaic.version = 11 : i64} {
  func.func @_lstm2_kernel(%arg0: i32, %arg1: memref<8x32xf32, #tpu.memory_space<vmem>>, %arg2: memref<32x128xf32, #tpu.memory_space<vmem>>, %arg3: memref<32x128xf32, #tpu.memory_space<vmem>>, %arg4: memref<1x128xf32, #tpu.memory_space<vmem>>, %arg5: memref<32x128xf32, #tpu.memory_space<vmem>>, %arg6: memref<32x128xf32, #tpu.memory_space<vmem>>, %arg7: memref<1x128xf32, #tpu.memory_space<vmem>>, %arg8: memref<8x32xf32, #tpu.memory_space<vmem>>, %arg9: memref<8x128xf32, #tpu.memory_space<vmem>>, %arg10: memref<8x32xf32, #tpu.memory_space<vmem>>, %arg11: memref<2x32xf32, #tpu.memory_space<vmem>>, %arg12: memref<2x32xf32, #tpu.memory_space<vmem>>, %arg13: memref<2x32xf32, #tpu.memory_space<vmem>>, %arg14: memref<2x32xf32, #tpu.memory_space<vmem>>) attributes {dimension_semantics = [#tpu.dimension_semantics<arbitrary>], iteration_bounds = array<i64: 2>, scalar_prefetch = 0 : i64, scratch_operands = 6 : i64, tpu.core_type = #tpu.core_type<tc>, window_params = [{transform_indices = @transform_0, window_bounds = array<i64: 8, 32>}, {pipeline_mode = #tpu.pipeline_mode<synchronous>, transform_indices = @transform_1, window_bounds = array<i64: 32, 128>}, {pipeline_mode = #tpu.pipeline_mode<synchronous>, transform_indices = @transform_2, window_bounds = array<i64: 32, 128>}, {pipeline_mode = #tpu.pipeline_mode<synchronous>, transform_indices = @transform_3, window_bounds = array<i64: 1, 128>}, {pipeline_mode = #tpu.pipeline_mode<synchronous>, transform_indices = @transform_4, window_bounds = array<i64: 32, 128>}, {pipeline_mode = #tpu.pipeline_mode<synchronous>, transform_indices = @transform_5, window_bounds = array<i64: 32, 128>}, {pipeline_mode = #tpu.pipeline_mode<synchronous>, transform_indices = @transform_6, window_bounds = array<i64: 1, 128>}, {transform_indices = @transform_7, window_bounds = array<i64: 8, 32>}]} {
    %c0_i32 = arith.constant 0 : i32
    %0 = arith.cmpi eq, %arg0, %c0_i32 : i32
    %1 = arith.extui %0 : i1 to i32
    %c0_i32_0 = arith.constant 0 : i32
    %2 = arith.cmpi ne, %1, %c0_i32_0 : i32
    scf.if %2 {
      %cst_111 = arith.constant 0.000000e+00 : f32
      %297 = vector.broadcast %cst_111 : f32 to vector<2x32xf32>
      %c0_112 = arith.constant 0 : index
      %c0_113 = arith.constant 0 : index
      %298 = vector.load %arg11[%c0_112, %c0_113] : memref<2x32xf32, #tpu.memory_space<vmem>>, vector<2x32xf32>
      tpu.vector_store %arg11[%c0_112, %c0_113], %297 {strides = array<i32>} : memref<2x32xf32, #tpu.memory_space<vmem>>, vector<2x32xf32>,
      %cst_114 = arith.constant 0.000000e+00 : f32
      %299 = vector.broadcast %cst_114 : f32 to vector<2x32xf32>
      %c0_115 = arith.constant 0 : index
      %c0_116 = arith.constant 0 : index
      %300 = vector.load %arg12[%c0_115, %c0_116] : memref<2x32xf32, #tpu.memory_space<vmem>>, vector<2x32xf32>
      tpu.vector_store %arg12[%c0_115, %c0_116], %299 {strides = array<i32>} : memref<2x32xf32, #tpu.memory_space<vmem>>, vector<2x32xf32>,
      %cst_117 = arith.constant 0.000000e+00 : f32
      %301 = vector.broadcast %cst_117 : f32 to vector<2x32xf32>
      %c0_118 = arith.constant 0 : index
      %c0_119 = arith.constant 0 : index
      %302 = vector.load %arg13[%c0_118, %c0_119] : memref<2x32xf32, #tpu.memory_space<vmem>>, vector<2x32xf32>
      tpu.vector_store %arg13[%c0_118, %c0_119], %301 {strides = array<i32>} : memref<2x32xf32, #tpu.memory_space<vmem>>, vector<2x32xf32>,
      %cst_120 = arith.constant 0.000000e+00 : f32
      %303 = vector.broadcast %cst_120 : f32 to vector<2x32xf32>
      %c0_121 = arith.constant 0 : index
      %c0_122 = arith.constant 0 : index
      %304 = vector.load %arg14[%c0_121, %c0_122] : memref<2x32xf32, #tpu.memory_space<vmem>>, vector<2x32xf32>
      tpu.vector_store %arg14[%c0_121, %c0_122], %303 {strides = array<i32>} : memref<2x32xf32, #tpu.memory_space<vmem>>, vector<2x32xf32>,
    } else {
    }
    %c0 = arith.constant 0 : index
    %c0_1 = arith.constant 0 : index
    %3 = vector.load %arg1[%c0, %c0_1] : memref<8x32xf32, #tpu.memory_space<vmem>>, vector<8x32xf32>
    %c0_2 = arith.constant 0 : index
    %c0_3 = arith.constant 0 : index
    %4 = vector.load %arg2[%c0_2, %c0_3] : memref<32x128xf32, #tpu.memory_space<vmem>>, vector<32x128xf32>
    %cst = arith.constant dense<0.000000e+00> : vector<8x128xf32>
    %5 = tpu.matmul %3, %4, %cst {dimension_numbers = #tpu.dot_dimension_numbers<[1], [0], [0], [1], [0, 0, 1, 1], [], []>} : vector<8x32xf32>, vector<32x128xf32>, vector<8x128xf32> -> vector<8x128xf32>
    %c0_4 = arith.constant 0 : index
    %c0_5 = arith.constant 0 : index
    %6 = vector.load %arg4[%c0_4, %c0_5] : memref<1x128xf32, #tpu.memory_space<vmem>>, vector<1x128xf32>
    %7 = vector.broadcast %6 : vector<1x128xf32> to vector<8x128xf32>
    %8 = arith.addf %5, %7 : vector<8x128xf32>
    %c0_6 = arith.constant 0 : index
    %c0_7 = arith.constant 0 : index
    %9 = vector.load %arg9[%c0_6, %c0_7] : memref<8x128xf32, #tpu.memory_space<vmem>>, vector<8x128xf32>
    tpu.vector_store %arg9[%c0_6, %c0_7], %8 {strides = array<i32>} : memref<8x128xf32, #tpu.memory_space<vmem>>, vector<8x128xf32>,
    %c0_8 = arith.constant 0 : index
    %c0_9 = arith.constant 0 : index
    %10 = vector.load %arg11[%c0_8, %c0_9] : memref<2x32xf32, #tpu.memory_space<vmem>>, vector<2x32xf32>
    %c0_10 = arith.constant 0 : index
    %c0_11 = arith.constant 0 : index
    %11 = vector.load %arg12[%c0_10, %c0_11] : memref<2x32xf32, #tpu.memory_space<vmem>>, vector<2x32xf32>
    %c0_i32_12 = arith.constant 0 : i32
    %c2_i32 = arith.constant 2 : i32
    %12 = arith.muli %c0_i32_12, %c2_i32 : i32
    %13 = tpu.assume_multiple %12, 2 : i32
    %14 = arith.index_cast %13 : i32 to index
    %c0_13 = arith.constant 0 : index
    %15 = vector.load %arg9[%14, %c0_13] : memref<8x128xf32, #tpu.memory_space<vmem>>, vector<2x128xf32>
    %c0_14 = arith.constant 0 : index
    %c0_15 = arith.constant 0 : index
    %16 = vector.load %arg3[%c0_14, %c0_15] : memref<32x128xf32, #tpu.memory_space<vmem>>, vector<32x128xf32>
    %cst_16 = arith.constant dense<0.000000e+00> : vector<2x128xf32>
    %17 = tpu.matmul %10, %16, %cst_16 {dimension_numbers = #tpu.dot_dimension_numbers<[1], [0], [0], [1], [0, 0, 1, 1], [], []>} : vector<2x32xf32>, vector<32x128xf32>, vector<2x128xf32> -> vector<2x128xf32>
    %18 = arith.addf %15, %17 : vector<2x128xf32>
    %19 = vector.extract_strided_slice %18 {offsets = [0, 0], sizes = [2, 32], strides = [1, 1]} : vector<2x128xf32> to vector<2x32xf32>
    %20 = arith.negf %19 : vector<2x32xf32>
    %21 = math.exp %20 : vector<2x32xf32>
    %cst_17 = arith.constant 1.000000e+00 : f32
    %22 = vector.broadcast %cst_17 : f32 to vector<2x32xf32>
    %23 = arith.addf %22, %21 : vector<2x32xf32>
    %24 = arith.divf %22, %23 : vector<2x32xf32>
    %25 = vector.extract_strided_slice %18 {offsets = [0, 32], sizes = [2, 32], strides = [1, 1]} : vector<2x128xf32> to vector<2x32xf32>
    %26 = arith.negf %25 : vector<2x32xf32>
    %27 = math.exp %26 : vector<2x32xf32>
    %cst_18 = arith.constant 1.000000e+00 : f32
    %28 = vector.broadcast %cst_18 : f32 to vector<2x32xf32>
    %29 = arith.addf %28, %27 : vector<2x32xf32>
    %30 = arith.divf %28, %29 : vector<2x32xf32>
    %31 = vector.extract_strided_slice %18 {offsets = [0, 64], sizes = [2, 32], strides = [1, 1]} : vector<2x128xf32> to vector<2x32xf32>
    %32 = math.tanh %31 : vector<2x32xf32>
    %33 = vector.extract_strided_slice %18 {offsets = [0, 96], sizes = [2, 32], strides = [1, 1]} : vector<2x128xf32> to vector<2x32xf32>
    %34 = arith.negf %33 : vector<2x32xf32>
    %35 = math.exp %34 : vector<2x32xf32>
    %cst_19 = arith.constant 1.000000e+00 : f32
    %36 = vector.broadcast %cst_19 : f32 to vector<2x32xf32>
    %37 = arith.addf %36, %35 : vector<2x32xf32>
    %38 = arith.divf %36, %37 : vector<2x32xf32>
    %39 = arith.mulf %30, %11 : vector<2x32xf32>
    %40 = arith.mulf %24, %32 : vector<2x32xf32>
    %41 = arith.addf %39, %40 : vector<2x32xf32>
    %42 = math.tanh %41 : vector<2x32xf32>
    %43 = arith.mulf %38, %42 : vector<2x32xf32>
    %44 = arith.index_cast %13 : i32 to index
    %c0_20 = arith.constant 0 : index
    %45 = vector.load %arg10[%44, %c0_20] : memref<8x32xf32, #tpu.memory_space<vmem>>, vector<2x32xf32>
    tpu.vector_store %arg10[%44, %c0_20], %43 {strides = array<i32>} : memref<8x32xf32, #tpu.memory_space<vmem>>, vector<2x32xf32>,
    %c1_i32 = arith.constant 1 : i32
    %c2_i32_21 = arith.constant 2 : i32
    %46 = arith.muli %c1_i32, %c2_i32_21 : i32
    %47 = tpu.assume_multiple %46, 2 : i32
    %48 = arith.index_cast %47 : i32 to index
    %c0_22 = arith.constant 0 : index
    %49 = vector.load %arg9[%48, %c0_22] : memref<8x128xf32, #tpu.memory_space<vmem>>, vector<2x128xf32>
    %c0_23 = arith.constant 0 : index
    %c0_24 = arith.constant 0 : index
    %50 = vector.load %arg3[%c0_23, %c0_24] : memref<32x128xf32, #tpu.memory_space<vmem>>, vector<32x128xf32>
    %cst_25 = arith.constant dense<0.000000e+00> : vector<2x128xf32>
    %51 = tpu.matmul %43, %50, %cst_25 {dimension_numbers = #tpu.dot_dimension_numbers<[1], [0], [0], [1], [0, 0, 1, 1], [], []>} : vector<2x32xf32>, vector<32x128xf32>, vector<2x128xf32> -> vector<2x128xf32>
    %52 = arith.addf %49, %51 : vector<2x128xf32>
    %53 = vector.extract_strided_slice %52 {offsets = [0, 0], sizes = [2, 32], strides = [1, 1]} : vector<2x128xf32> to vector<2x32xf32>
    %54 = arith.negf %53 : vector<2x32xf32>
    %55 = math.exp %54 : vector<2x32xf32>
    %cst_26 = arith.constant 1.000000e+00 : f32
    %56 = vector.broadcast %cst_26 : f32 to vector<2x32xf32>
    %57 = arith.addf %56, %55 : vector<2x32xf32>
    %58 = arith.divf %56, %57 : vector<2x32xf32>
    %59 = vector.extract_strided_slice %52 {offsets = [0, 32], sizes = [2, 32], strides = [1, 1]} : vector<2x128xf32> to vector<2x32xf32>
    %60 = arith.negf %59 : vector<2x32xf32>
    %61 = math.exp %60 : vector<2x32xf32>
    %cst_27 = arith.constant 1.000000e+00 : f32
    %62 = vector.broadcast %cst_27 : f32 to vector<2x32xf32>
    %63 = arith.addf %62, %61 : vector<2x32xf32>
    %64 = arith.divf %62, %63 : vector<2x32xf32>
    %65 = vector.extract_strided_slice %52 {offsets = [0, 64], sizes = [2, 32], strides = [1, 1]} : vector<2x128xf32> to vector<2x32xf32>
    %66 = math.tanh %65 : vector<2x32xf32>
    %67 = vector.extract_strided_slice %52 {offsets = [0, 96], sizes = [2, 32], strides = [1, 1]} : vector<2x128xf32> to vector<2x32xf32>
    %68 = arith.negf %67 : vector<2x32xf32>
    %69 = math.exp %68 : vector<2x32xf32>
    %cst_28 = arith.constant 1.000000e+00 : f32
    %70 = vector.broadcast %cst_28 : f32 to vector<2x32xf32>
    %71 = arith.addf %70, %69 : vector<2x32xf32>
    %72 = arith.divf %70, %71 : vector<2x32xf32>
    %73 = arith.mulf %64, %41 : vector<2x32xf32>
    %74 = arith.mulf %58, %66 : vector<2x32xf32>
    %75 = arith.addf %73, %74 : vector<2x32xf32>
    %76 = math.tanh %75 : vector<2x32xf32>
    %77 = arith.mulf %72, %76 : vector<2x32xf32>
    %78 = arith.index_cast %47 : i32 to index
    %c0_29 = arith.constant 0 : index
    %79 = vector.load %arg10[%78, %c0_29] : memref<8x32xf32, #tpu.memory_space<vmem>>, vector<2x32xf32>
    tpu.vector_store %arg10[%78, %c0_29], %77 {strides = array<i32>} : memref<8x32xf32, #tpu.memory_space<vmem>>, vector<2x32xf32>,
    %c2_i32_30 = arith.constant 2 : i32
    %c2_i32_31 = arith.constant 2 : i32
    %80 = arith.muli %c2_i32_30, %c2_i32_31 : i32
    %81 = tpu.assume_multiple %80, 2 : i32
    %82 = arith.index_cast %81 : i32 to index
    %c0_32 = arith.constant 0 : index
    %83 = vector.load %arg9[%82, %c0_32] : memref<8x128xf32, #tpu.memory_space<vmem>>, vector<2x128xf32>
    %c0_33 = arith.constant 0 : index
    %c0_34 = arith.constant 0 : index
    %84 = vector.load %arg3[%c0_33, %c0_34] : memref<32x128xf32, #tpu.memory_space<vmem>>, vector<32x128xf32>
    %cst_35 = arith.constant dense<0.000000e+00> : vector<2x128xf32>
    %85 = tpu.matmul %77, %84, %cst_35 {dimension_numbers = #tpu.dot_dimension_numbers<[1], [0], [0], [1], [0, 0, 1, 1], [], []>} : vector<2x32xf32>, vector<32x128xf32>, vector<2x128xf32> -> vector<2x128xf32>
    %86 = arith.addf %83, %85 : vector<2x128xf32>
    %87 = vector.extract_strided_slice %86 {offsets = [0, 0], sizes = [2, 32], strides = [1, 1]} : vector<2x128xf32> to vector<2x32xf32>
    %88 = arith.negf %87 : vector<2x32xf32>
    %89 = math.exp %88 : vector<2x32xf32>
    %cst_36 = arith.constant 1.000000e+00 : f32
    %90 = vector.broadcast %cst_36 : f32 to vector<2x32xf32>
    %91 = arith.addf %90, %89 : vector<2x32xf32>
    %92 = arith.divf %90, %91 : vector<2x32xf32>
    %93 = vector.extract_strided_slice %86 {offsets = [0, 32], sizes = [2, 32], strides = [1, 1]} : vector<2x128xf32> to vector<2x32xf32>
    %94 = arith.negf %93 : vector<2x32xf32>
    %95 = math.exp %94 : vector<2x32xf32>
    %cst_37 = arith.constant 1.000000e+00 : f32
    %96 = vector.broadcast %cst_37 : f32 to vector<2x32xf32>
    %97 = arith.addf %96, %95 : vector<2x32xf32>
    %98 = arith.divf %96, %97 : vector<2x32xf32>
    %99 = vector.extract_strided_slice %86 {offsets = [0, 64], sizes = [2, 32], strides = [1, 1]} : vector<2x128xf32> to vector<2x32xf32>
    %100 = math.tanh %99 : vector<2x32xf32>
    %101 = vector.extract_strided_slice %86 {offsets = [0, 96], sizes = [2, 32], strides = [1, 1]} : vector<2x128xf32> to vector<2x32xf32>
    %102 = arith.negf %101 : vector<2x32xf32>
    %103 = math.exp %102 : vector<2x32xf32>
    %cst_38 = arith.constant 1.000000e+00 : f32
    %104 = vector.broadcast %cst_38 : f32 to vector<2x32xf32>
    %105 = arith.addf %104, %103 : vector<2x32xf32>
    %106 = arith.divf %104, %105 : vector<2x32xf32>
    %107 = arith.mulf %98, %75 : vector<2x32xf32>
    %108 = arith.mulf %92, %100 : vector<2x32xf32>
    %109 = arith.addf %107, %108 : vector<2x32xf32>
    %110 = math.tanh %109 : vector<2x32xf32>
    %111 = arith.mulf %106, %110 : vector<2x32xf32>
    %112 = arith.index_cast %81 : i32 to index
    %c0_39 = arith.constant 0 : index
    %113 = vector.load %arg10[%112, %c0_39] : memref<8x32xf32, #tpu.memory_space<vmem>>, vector<2x32xf32>
    tpu.vector_store %arg10[%112, %c0_39], %111 {strides = array<i32>} : memref<8x32xf32, #tpu.memory_space<vmem>>, vector<2x32xf32>,
    %c3_i32 = arith.constant 3 : i32
    %c2_i32_40 = arith.constant 2 : i32
    %114 = arith.muli %c3_i32, %c2_i32_40 : i32
    %115 = tpu.assume_multiple %114, 2 : i32
    %116 = arith.index_cast %115 : i32 to index
    %c0_41 = arith.constant 0 : index
    %117 = vector.load %arg9[%116, %c0_41] : memref<8x128xf32, #tpu.memory_space<vmem>>, vector<2x128xf32>
    %c0_42 = arith.constant 0 : index
    %c0_43 = arith.constant 0 : index
    %118 = vector.load %arg3[%c0_42, %c0_43] : memref<32x128xf32, #tpu.memory_space<vmem>>, vector<32x128xf32>
    %cst_44 = arith.constant dense<0.000000e+00> : vector<2x128xf32>
    %119 = tpu.matmul %111, %118, %cst_44 {dimension_numbers = #tpu.dot_dimension_numbers<[1], [0], [0], [1], [0, 0, 1, 1], [], []>} : vector<2x32xf32>, vector<32x128xf32>, vector<2x128xf32> -> vector<2x128xf32>
    %120 = arith.addf %117, %119 : vector<2x128xf32>
    %121 = vector.extract_strided_slice %120 {offsets = [0, 0], sizes = [2, 32], strides = [1, 1]} : vector<2x128xf32> to vector<2x32xf32>
    %122 = arith.negf %121 : vector<2x32xf32>
    %123 = math.exp %122 : vector<2x32xf32>
    %cst_45 = arith.constant 1.000000e+00 : f32
    %124 = vector.broadcast %cst_45 : f32 to vector<2x32xf32>
    %125 = arith.addf %124, %123 : vector<2x32xf32>
    %126 = arith.divf %124, %125 : vector<2x32xf32>
    %127 = vector.extract_strided_slice %120 {offsets = [0, 32], sizes = [2, 32], strides = [1, 1]} : vector<2x128xf32> to vector<2x32xf32>
    %128 = arith.negf %127 : vector<2x32xf32>
    %129 = math.exp %128 : vector<2x32xf32>
    %cst_46 = arith.constant 1.000000e+00 : f32
    %130 = vector.broadcast %cst_46 : f32 to vector<2x32xf32>
    %131 = arith.addf %130, %129 : vector<2x32xf32>
    %132 = arith.divf %130, %131 : vector<2x32xf32>
    %133 = vector.extract_strided_slice %120 {offsets = [0, 64], sizes = [2, 32], strides = [1, 1]} : vector<2x128xf32> to vector<2x32xf32>
    %134 = math.tanh %133 : vector<2x32xf32>
    %135 = vector.extract_strided_slice %120 {offsets = [0, 96], sizes = [2, 32], strides = [1, 1]} : vector<2x128xf32> to vector<2x32xf32>
    %136 = arith.negf %135 : vector<2x32xf32>
    %137 = math.exp %136 : vector<2x32xf32>
    %cst_47 = arith.constant 1.000000e+00 : f32
    %138 = vector.broadcast %cst_47 : f32 to vector<2x32xf32>
    %139 = arith.addf %138, %137 : vector<2x32xf32>
    %140 = arith.divf %138, %139 : vector<2x32xf32>
    %141 = arith.mulf %132, %109 : vector<2x32xf32>
    %142 = arith.mulf %126, %134 : vector<2x32xf32>
    %143 = arith.addf %141, %142 : vector<2x32xf32>
    %144 = math.tanh %143 : vector<2x32xf32>
    %145 = arith.mulf %140, %144 : vector<2x32xf32>
    %146 = arith.index_cast %115 : i32 to index
    %c0_48 = arith.constant 0 : index
    %147 = vector.load %arg10[%146, %c0_48] : memref<8x32xf32, #tpu.memory_space<vmem>>, vector<2x32xf32>
    tpu.vector_store %arg10[%146, %c0_48], %145 {strides = array<i32>} : memref<8x32xf32, #tpu.memory_space<vmem>>, vector<2x32xf32>,
    %c4_i32 = arith.constant 4 : i32
    %c0_49 = arith.constant 0 : index
    %c0_50 = arith.constant 0 : index
    %148 = vector.load %arg11[%c0_49, %c0_50] : memref<2x32xf32, #tpu.memory_space<vmem>>, vector<2x32xf32>
    tpu.vector_store %arg11[%c0_49, %c0_50], %145 {strides = array<i32>} : memref<2x32xf32, #tpu.memory_space<vmem>>, vector<2x32xf32>,
    %c0_51 = arith.constant 0 : index
    %c0_52 = arith.constant 0 : index
    %149 = vector.load %arg12[%c0_51, %c0_52] : memref<2x32xf32, #tpu.memory_space<vmem>>, vector<2x32xf32>
    tpu.vector_store %arg12[%c0_51, %c0_52], %143 {strides = array<i32>} : memref<2x32xf32, #tpu.memory_space<vmem>>, vector<2x32xf32>,
    %c0_53 = arith.constant 0 : index
    %c0_54 = arith.constant 0 : index
    %150 = vector.load %arg10[%c0_53, %c0_54] : memref<8x32xf32, #tpu.memory_space<vmem>>, vector<8x32xf32>
    %c0_55 = arith.constant 0 : index
    %c0_56 = arith.constant 0 : index
    %151 = vector.load %arg5[%c0_55, %c0_56] : memref<32x128xf32, #tpu.memory_space<vmem>>, vector<32x128xf32>
    %cst_57 = arith.constant dense<0.000000e+00> : vector<8x128xf32>
    %152 = tpu.matmul %150, %151, %cst_57 {dimension_numbers = #tpu.dot_dimension_numbers<[1], [0], [0], [1], [0, 0, 1, 1], [], []>} : vector<8x32xf32>, vector<32x128xf32>, vector<8x128xf32> -> vector<8x128xf32>
    %c0_58 = arith.constant 0 : index
    %c0_59 = arith.constant 0 : index
    %153 = vector.load %arg7[%c0_58, %c0_59] : memref<1x128xf32, #tpu.memory_space<vmem>>, vector<1x128xf32>
    %154 = vector.broadcast %153 : vector<1x128xf32> to vector<8x128xf32>
    %155 = arith.addf %152, %154 : vector<8x128xf32>
    %c0_60 = arith.constant 0 : index
    %c0_61 = arith.constant 0 : index
    %156 = vector.load %arg9[%c0_60, %c0_61] : memref<8x128xf32, #tpu.memory_space<vmem>>, vector<8x128xf32>
    tpu.vector_store %arg9[%c0_60, %c0_61], %155 {strides = array<i32>} : memref<8x128xf32, #tpu.memory_space<vmem>>, vector<8x128xf32>,
    %c0_62 = arith.constant 0 : index
    %c0_63 = arith.constant 0 : index
    %157 = vector.load %arg13[%c0_62, %c0_63] : memref<2x32xf32, #tpu.memory_space<vmem>>, vector<2x32xf32>
    %c0_64 = arith.constant 0 : index
    %c0_65 = arith.constant 0 : index
    %158 = vector.load %arg14[%c0_64, %c0_65] : memref<2x32xf32, #tpu.memory_space<vmem>>, vector<2x32xf32>
    %c0_i32_66 = arith.constant 0 : i32
    %c2_i32_67 = arith.constant 2 : i32
    %159 = arith.muli %c0_i32_66, %c2_i32_67 : i32
    %160 = tpu.assume_multiple %159, 2 : i32
    %161 = arith.index_cast %160 : i32 to index
    %c0_68 = arith.constant 0 : index
    %162 = vector.load %arg9[%161, %c0_68] : memref<8x128xf32, #tpu.memory_space<vmem>>, vector<2x128xf32>
    %c0_69 = arith.constant 0 : index
    %c0_70 = arith.constant 0 : index
    %163 = vector.load %arg6[%c0_69, %c0_70] : memref<32x128xf32, #tpu.memory_space<vmem>>, vector<32x128xf32>
    %cst_71 = arith.constant dense<0.000000e+00> : vector<2x128xf32>
    %164 = tpu.matmul %157, %163, %cst_71 {dimension_numbers = #tpu.dot_dimension_numbers<[1], [0], [0], [1], [0, 0, 1, 1], [], []>} : vector<2x32xf32>, vector<32x128xf32>, vector<2x128xf32> -> vector<2x128xf32>
    %165 = arith.addf %162, %164 : vector<2x128xf32>
    %166 = vector.extract_strided_slice %165 {offsets = [0, 0], sizes = [2, 32], strides = [1, 1]} : vector<2x128xf32> to vector<2x32xf32>
    %167 = arith.negf %166 : vector<2x32xf32>
    %168 = math.exp %167 : vector<2x32xf32>
    %cst_72 = arith.constant 1.000000e+00 : f32
    %169 = vector.broadcast %cst_72 : f32 to vector<2x32xf32>
    %170 = arith.addf %169, %168 : vector<2x32xf32>
    %171 = arith.divf %169, %170 : vector<2x32xf32>
    %172 = vector.extract_strided_slice %165 {offsets = [0, 32], sizes = [2, 32], strides = [1, 1]} : vector<2x128xf32> to vector<2x32xf32>
    %173 = arith.negf %172 : vector<2x32xf32>
    %174 = math.exp %173 : vector<2x32xf32>
    %cst_73 = arith.constant 1.000000e+00 : f32
    %175 = vector.broadcast %cst_73 : f32 to vector<2x32xf32>
    %176 = arith.addf %175, %174 : vector<2x32xf32>
    %177 = arith.divf %175, %176 : vector<2x32xf32>
    %178 = vector.extract_strided_slice %165 {offsets = [0, 64], sizes = [2, 32], strides = [1, 1]} : vector<2x128xf32> to vector<2x32xf32>
    %179 = math.tanh %178 : vector<2x32xf32>
    %180 = vector.extract_strided_slice %165 {offsets = [0, 96], sizes = [2, 32], strides = [1, 1]} : vector<2x128xf32> to vector<2x32xf32>
    %181 = arith.negf %180 : vector<2x32xf32>
    %182 = math.exp %181 : vector<2x32xf32>
    %cst_74 = arith.constant 1.000000e+00 : f32
    %183 = vector.broadcast %cst_74 : f32 to vector<2x32xf32>
    %184 = arith.addf %183, %182 : vector<2x32xf32>
    %185 = arith.divf %183, %184 : vector<2x32xf32>
    %186 = arith.mulf %177, %158 : vector<2x32xf32>
    %187 = arith.mulf %171, %179 : vector<2x32xf32>
    %188 = arith.addf %186, %187 : vector<2x32xf32>
    %189 = math.tanh %188 : vector<2x32xf32>
    %190 = arith.mulf %185, %189 : vector<2x32xf32>
    %191 = arith.index_cast %160 : i32 to index
    %c0_75 = arith.constant 0 : index
    %192 = vector.load %arg8[%191, %c0_75] : memref<8x32xf32, #tpu.memory_space<vmem>>, vector<2x32xf32>
    tpu.vector_store %arg8[%191, %c0_75], %190 {strides = array<i32>} : memref<8x32xf32, #tpu.memory_space<vmem>>, vector<2x32xf32>,
    %c1_i32_76 = arith.constant 1 : i32
    %c2_i32_77 = arith.constant 2 : i32
    %193 = arith.muli %c1_i32_76, %c2_i32_77 : i32
    %194 = tpu.assume_multiple %193, 2 : i32
    %195 = arith.index_cast %194 : i32 to index
    %c0_78 = arith.constant 0 : index
    %196 = vector.load %arg9[%195, %c0_78] : memref<8x128xf32, #tpu.memory_space<vmem>>, vector<2x128xf32>
    %c0_79 = arith.constant 0 : index
    %c0_80 = arith.constant 0 : index
    %197 = vector.load %arg6[%c0_79, %c0_80] : memref<32x128xf32, #tpu.memory_space<vmem>>, vector<32x128xf32>
    %cst_81 = arith.constant dense<0.000000e+00> : vector<2x128xf32>
    %198 = tpu.matmul %190, %197, %cst_81 {dimension_numbers = #tpu.dot_dimension_numbers<[1], [0], [0], [1], [0, 0, 1, 1], [], []>} : vector<2x32xf32>, vector<32x128xf32>, vector<2x128xf32> -> vector<2x128xf32>
    %199 = arith.addf %196, %198 : vector<2x128xf32>
    %200 = vector.extract_strided_slice %199 {offsets = [0, 0], sizes = [2, 32], strides = [1, 1]} : vector<2x128xf32> to vector<2x32xf32>
    %201 = arith.negf %200 : vector<2x32xf32>
    %202 = math.exp %201 : vector<2x32xf32>
    %cst_82 = arith.constant 1.000000e+00 : f32
    %203 = vector.broadcast %cst_82 : f32 to vector<2x32xf32>
    %204 = arith.addf %203, %202 : vector<2x32xf32>
    %205 = arith.divf %203, %204 : vector<2x32xf32>
    %206 = vector.extract_strided_slice %199 {offsets = [0, 32], sizes = [2, 32], strides = [1, 1]} : vector<2x128xf32> to vector<2x32xf32>
    %207 = arith.negf %206 : vector<2x32xf32>
    %208 = math.exp %207 : vector<2x32xf32>
    %cst_83 = arith.constant 1.000000e+00 : f32
    %209 = vector.broadcast %cst_83 : f32 to vector<2x32xf32>
    %210 = arith.addf %209, %208 : vector<2x32xf32>
    %211 = arith.divf %209, %210 : vector<2x32xf32>
    %212 = vector.extract_strided_slice %199 {offsets = [0, 64], sizes = [2, 32], strides = [1, 1]} : vector<2x128xf32> to vector<2x32xf32>
    %213 = math.tanh %212 : vector<2x32xf32>
    %214 = vector.extract_strided_slice %199 {offsets = [0, 96], sizes = [2, 32], strides = [1, 1]} : vector<2x128xf32> to vector<2x32xf32>
    %215 = arith.negf %214 : vector<2x32xf32>
    %216 = math.exp %215 : vector<2x32xf32>
    %cst_84 = arith.constant 1.000000e+00 : f32
    %217 = vector.broadcast %cst_84 : f32 to vector<2x32xf32>
    %218 = arith.addf %217, %216 : vector<2x32xf32>
    %219 = arith.divf %217, %218 : vector<2x32xf32>
    %220 = arith.mulf %211, %188 : vector<2x32xf32>
    %221 = arith.mulf %205, %213 : vector<2x32xf32>
    %222 = arith.addf %220, %221 : vector<2x32xf32>
    %223 = math.tanh %222 : vector<2x32xf32>
    %224 = arith.mulf %219, %223 : vector<2x32xf32>
    %225 = arith.index_cast %194 : i32 to index
    %c0_85 = arith.constant 0 : index
    %226 = vector.load %arg8[%225, %c0_85] : memref<8x32xf32, #tpu.memory_space<vmem>>, vector<2x32xf32>
    tpu.vector_store %arg8[%225, %c0_85], %224 {strides = array<i32>} : memref<8x32xf32, #tpu.memory_space<vmem>>, vector<2x32xf32>,
    %c2_i32_86 = arith.constant 2 : i32
    %c2_i32_87 = arith.constant 2 : i32
    %227 = arith.muli %c2_i32_86, %c2_i32_87 : i32
    %228 = tpu.assume_multiple %227, 2 : i32
    %229 = arith.index_cast %228 : i32 to index
    %c0_88 = arith.constant 0 : index
    %230 = vector.load %arg9[%229, %c0_88] : memref<8x128xf32, #tpu.memory_space<vmem>>, vector<2x128xf32>
    %c0_89 = arith.constant 0 : index
    %c0_90 = arith.constant 0 : index
    %231 = vector.load %arg6[%c0_89, %c0_90] : memref<32x128xf32, #tpu.memory_space<vmem>>, vector<32x128xf32>
    %cst_91 = arith.constant dense<0.000000e+00> : vector<2x128xf32>
    %232 = tpu.matmul %224, %231, %cst_91 {dimension_numbers = #tpu.dot_dimension_numbers<[1], [0], [0], [1], [0, 0, 1, 1], [], []>} : vector<2x32xf32>, vector<32x128xf32>, vector<2x128xf32> -> vector<2x128xf32>
    %233 = arith.addf %230, %232 : vector<2x128xf32>
    %234 = vector.extract_strided_slice %233 {offsets = [0, 0], sizes = [2, 32], strides = [1, 1]} : vector<2x128xf32> to vector<2x32xf32>
    %235 = arith.negf %234 : vector<2x32xf32>
    %236 = math.exp %235 : vector<2x32xf32>
    %cst_92 = arith.constant 1.000000e+00 : f32
    %237 = vector.broadcast %cst_92 : f32 to vector<2x32xf32>
    %238 = arith.addf %237, %236 : vector<2x32xf32>
    %239 = arith.divf %237, %238 : vector<2x32xf32>
    %240 = vector.extract_strided_slice %233 {offsets = [0, 32], sizes = [2, 32], strides = [1, 1]} : vector<2x128xf32> to vector<2x32xf32>
    %241 = arith.negf %240 : vector<2x32xf32>
    %242 = math.exp %241 : vector<2x32xf32>
    %cst_93 = arith.constant 1.000000e+00 : f32
    %243 = vector.broadcast %cst_93 : f32 to vector<2x32xf32>
    %244 = arith.addf %243, %242 : vector<2x32xf32>
    %245 = arith.divf %243, %244 : vector<2x32xf32>
    %246 = vector.extract_strided_slice %233 {offsets = [0, 64], sizes = [2, 32], strides = [1, 1]} : vector<2x128xf32> to vector<2x32xf32>
    %247 = math.tanh %246 : vector<2x32xf32>
    %248 = vector.extract_strided_slice %233 {offsets = [0, 96], sizes = [2, 32], strides = [1, 1]} : vector<2x128xf32> to vector<2x32xf32>
    %249 = arith.negf %248 : vector<2x32xf32>
    %250 = math.exp %249 : vector<2x32xf32>
    %cst_94 = arith.constant 1.000000e+00 : f32
    %251 = vector.broadcast %cst_94 : f32 to vector<2x32xf32>
    %252 = arith.addf %251, %250 : vector<2x32xf32>
    %253 = arith.divf %251, %252 : vector<2x32xf32>
    %254 = arith.mulf %245, %222 : vector<2x32xf32>
    %255 = arith.mulf %239, %247 : vector<2x32xf32>
    %256 = arith.addf %254, %255 : vector<2x32xf32>
    %257 = math.tanh %256 : vector<2x32xf32>
    %258 = arith.mulf %253, %257 : vector<2x32xf32>
    %259 = arith.index_cast %228 : i32 to index
    %c0_95 = arith.constant 0 : index
    %260 = vector.load %arg8[%259, %c0_95] : memref<8x32xf32, #tpu.memory_space<vmem>>, vector<2x32xf32>
    tpu.vector_store %arg8[%259, %c0_95], %258 {strides = array<i32>} : memref<8x32xf32, #tpu.memory_space<vmem>>, vector<2x32xf32>,
    %c3_i32_96 = arith.constant 3 : i32
    %c2_i32_97 = arith.constant 2 : i32
    %261 = arith.muli %c3_i32_96, %c2_i32_97 : i32
    %262 = tpu.assume_multiple %261, 2 : i32
    %263 = arith.index_cast %262 : i32 to index
    %c0_98 = arith.constant 0 : index
    %264 = vector.load %arg9[%263, %c0_98] : memref<8x128xf32, #tpu.memory_space<vmem>>, vector<2x128xf32>
    %c0_99 = arith.constant 0 : index
    %c0_100 = arith.constant 0 : index
    %265 = vector.load %arg6[%c0_99, %c0_100] : memref<32x128xf32, #tpu.memory_space<vmem>>, vector<32x128xf32>
    %cst_101 = arith.constant dense<0.000000e+00> : vector<2x128xf32>
    %266 = tpu.matmul %258, %265, %cst_101 {dimension_numbers = #tpu.dot_dimension_numbers<[1], [0], [0], [1], [0, 0, 1, 1], [], []>} : vector<2x32xf32>, vector<32x128xf32>, vector<2x128xf32> -> vector<2x128xf32>
    %267 = arith.addf %264, %266 : vector<2x128xf32>
    %268 = vector.extract_strided_slice %267 {offsets = [0, 0], sizes = [2, 32], strides = [1, 1]} : vector<2x128xf32> to vector<2x32xf32>
    %269 = arith.negf %268 : vector<2x32xf32>
    %270 = math.exp %269 : vector<2x32xf32>
    %cst_102 = arith.constant 1.000000e+00 : f32
    %271 = vector.broadcast %cst_102 : f32 to vector<2x32xf32>
    %272 = arith.addf %271, %270 : vector<2x32xf32>
    %273 = arith.divf %271, %272 : vector<2x32xf32>
    %274 = vector.extract_strided_slice %267 {offsets = [0, 32], sizes = [2, 32], strides = [1, 1]} : vector<2x128xf32> to vector<2x32xf32>
    %275 = arith.negf %274 : vector<2x32xf32>
    %276 = math.exp %275 : vector<2x32xf32>
    %cst_103 = arith.constant 1.000000e+00 : f32
    %277 = vector.broadcast %cst_103 : f32 to vector<2x32xf32>
    %278 = arith.addf %277, %276 : vector<2x32xf32>
    %279 = arith.divf %277, %278 : vector<2x32xf32>
    %280 = vector.extract_strided_slice %267 {offsets = [0, 64], sizes = [2, 32], strides = [1, 1]} : vector<2x128xf32> to vector<2x32xf32>
    %281 = math.tanh %280 : vector<2x32xf32>
    %282 = vector.extract_strided_slice %267 {offsets = [0, 96], sizes = [2, 32], strides = [1, 1]} : vector<2x128xf32> to vector<2x32xf32>
    %283 = arith.negf %282 : vector<2x32xf32>
    %284 = math.exp %283 : vector<2x32xf32>
    %cst_104 = arith.constant 1.000000e+00 : f32
    %285 = vector.broadcast %cst_104 : f32 to vector<2x32xf32>
    %286 = arith.addf %285, %284 : vector<2x32xf32>
    %287 = arith.divf %285, %286 : vector<2x32xf32>
    %288 = arith.mulf %279, %256 : vector<2x32xf32>
    %289 = arith.mulf %273, %281 : vector<2x32xf32>
    %290 = arith.addf %288, %289 : vector<2x32xf32>
    %291 = math.tanh %290 : vector<2x32xf32>
    %292 = arith.mulf %287, %291 : vector<2x32xf32>
    %293 = arith.index_cast %262 : i32 to index
    %c0_105 = arith.constant 0 : index
    %294 = vector.load %arg8[%293, %c0_105] : memref<8x32xf32, #tpu.memory_space<vmem>>, vector<2x32xf32>
    tpu.vector_store %arg8[%293, %c0_105], %292 {strides = array<i32>} : memref<8x32xf32, #tpu.memory_space<vmem>>, vector<2x32xf32>,
    %c4_i32_106 = arith.constant 4 : i32
    %c0_107 = arith.constant 0 : index
    %c0_108 = arith.constant 0 : index
    %295 = vector.load %arg13[%c0_107, %c0_108] : memref<2x32xf32, #tpu.memory_space<vmem>>, vector<2x32xf32>
    tpu.vector_store %arg13[%c0_107, %c0_108], %292 {strides = array<i32>} : memref<2x32xf32, #tpu.memory_space<vmem>>, vector<2x32xf32>,
    %c0_109 = arith.constant 0 : index
    %c0_110 = arith.constant 0 : index
    %296 = vector.load %arg14[%c0_109, %c0_110] : memref<2x32xf32, #tpu.memory_space<vmem>>, vector<2x32xf32>
    tpu.vector_store %arg14[%c0_109, %c0_110], %290 {strides = array<i32>} : memref<2x32xf32, #tpu.memory_space<vmem>>, vector<2x32xf32>,
    return
  }
  func.func @transform_0(%arg0: i32) -> (i32, i32) {
    %c0_i32 = arith.constant 0 : i32
    %c0_i32_0 = arith.constant 0 : i32
    return %arg0, %c0_i32 : i32, i32
  }
  func.func @transform_1(%arg0: i32) -> (i32, i32) {
    %c0_i32 = arith.constant 0 : i32
    %c0_i32_0 = arith.constant 0 : i32
    %c0_i32_1 = arith.constant 0 : i32
    return %c0_i32, %c0_i32_0 : i32, i32
  }
  func.func @transform_2(%arg0: i32) -> (i32, i32) {
    %c0_i32 = arith.constant 0 : i32
    %c0_i32_0 = arith.constant 0 : i32
    %c0_i32_1 = arith.constant 0 : i32
    return %c0_i32, %c0_i32_0 : i32, i32
  }
  func.func @transform_3(%arg0: i32) -> (i32, i32) {
    %c0_i32 = arith.constant 0 : i32
    %c0_i32_0 = arith.constant 0 : i32
    %c0_i32_1 = arith.constant 0 : i32
    return %c0_i32, %c0_i32_0 : i32, i32
  }
  func.func @transform_4(%arg0: i32) -> (i32, i32) {
    %c0_i32 = arith.constant 0 : i32
    %c0_i32_0 = arith.constant 0 : i32
    %c0_i32_1 = arith.constant 0 : i32
    return %c0_i32, %c0_i32_0 : i32, i32
  }
  func.func @transform_5(%arg0: i32) -> (i32, i32) {
    %c0_i32 = arith.constant 0 : i32
    %c0_i32_0 = arith.constant 0 : i32
    %c0_i32_1 = arith.constant 0 : i32
    return %c0_i32, %c0_i32_0 : i32, i32
  }
  func.func @transform_6(%arg0: i32) -> (i32, i32) {
    %c0_i32 = arith.constant 0 : i32
    %c0_i32_0 = arith.constant 0 : i32
    %c0_i32_1 = arith.constant 0 : i32
    return %c0_i32, %c0_i32_0 : i32, i32
  }
  func.func @transform_7(%arg0: i32) -> (i32, i32) {
    %c0_i32 = arith.constant 0 : i32
    %c0_i32_0 = arith.constant 0 : i32
    return %arg0, %c0_i32 : i32, i32
  }
}

</mosaic_0001>

<llo_original>
// kernel: tpu_custom_call.1
$region0: #{tpu_custom_call.1}
  #allocation0 [shape = 'u32[]', space=smem, size = 0x4, offset = 0x4, fixed_abs, tag = 'smem constant byte address 0x4 - core index']
  #allocation1 [shape = 'u32[144,128]{1,0:T(1,128)}', space=vmem, size = 0x12000, scoped, tag = 'internal scratch']
  #allocation2 [shape = 'f32[8,128]{1,0:T(8,128)}', space=vmem, size = 0x1000, scoped, tag = 'scratch operand']
  #allocation3 [shape = 'f32[8,32]{1,0:T(8,128)}', space=vmem, size = 0x1000, scoped, tag = 'scratch operand']
  #allocation4 [shape = 'f32[2,32]{1,0:T(2,128)}', space=vmem, size = 0x400, scoped, tag = 'scratch operand']
  #allocation5 [shape = 'f32[2,32]{1,0:T(2,128)}', space=vmem, size = 0x400, scoped, tag = 'scratch operand']
  #allocation6 [shape = 'f32[2,32]{1,0:T(2,128)}', space=vmem, size = 0x400, scoped, tag = 'scratch operand']
  #allocation7 [shape = 'f32[2,32]{1,0:T(2,128)}', space=vmem, size = 0x400, scoped, tag = 'scratch operand']
  %s0 = inlined_call_operand.hbm [shape: f32[16,32], index: 0, kind: input, shape index: {}]
  %s1 = inlined_call_operand.hbm [shape: f32[32,128], index: 1, kind: input, shape index: {}]
  %s2 = inlined_call_operand.hbm [shape: f32[32,128], index: 2, kind: input, shape index: {}]
  %s3 = inlined_call_operand.vmem [shape: f32[1,128], index: 3, kind: input, shape index: {}]
  %s4 = inlined_call_operand.hbm [shape: f32[32,128], index: 4, kind: input, shape index: {}]
  %s5 = inlined_call_operand.hbm [shape: f32[32,128], index: 5, kind: input, shape index: {}]
  %s6 = inlined_call_operand.vmem [shape: f32[1,128], index: 6, kind: input, shape index: {}]
  %s7 = inlined_call_operand.hbm [shape: f32[16,32], index: 7, kind: output, shape index: {}]
  %s8 = sld [smem:[#allocation0]]
  $region85: #{tpu_custom_call.1} parent=0
    _
  %s10 = ssub.s32 1, %s8
  %s11 = scalar_select 0, %s10, %s8
  $region1: #{tpu_custom_call.1} parent=0
    #allocation8 [shape = 'u8[8192]{0}', space=vmem, size = 0x2000, scoped, tag = 'input window, operand 0']
    #allocation9 [shape = 's32[2]{0}', space=sflag, size = 0x8, scoped, tag = 'scoped memory for tpu_custom_call.1']
    #allocation10 [shape = 's32[2]{0}', space=sflag, size = 0x8, scoped, tag = 'scoped memory for tpu_custom_call.1']
    #allocation11 [shape = 'u8[16384]{0}', space=vmem, size = 0x4000, scoped, tag = 'input window, operand 1, single buffered']
    #allocation12 [shape = 's32[1]{0}', space=sflag, size = 0x4, scoped, tag = 'scoped memory for tpu_custom_call.1']
    #allocation13 [shape = 'u8[16384]{0}', space=vmem, size = 0x4000, scoped, tag = 'input window, operand 2, single buffered']
    #allocation14 [shape = 'u8[16384]{0}', space=vmem, size = 0x4000, scoped, tag = 'input window, operand 4, single buffered']
    #allocation15 [shape = 's32[1]{0}', space=sflag, size = 0x4, scoped, tag = 'scoped memory for tpu_custom_call.1']
    #allocation16 [shape = 'u8[16384]{0}', space=vmem, size = 0x4000, scoped, tag = 'input window, operand 5, single buffered']
    #allocation17 [shape = 'u8[8192]{0}', space=vmem, size = 0x2000, scoped, tag = 'output window, operand 0']
    %12 = vsyncpa [#allocation9], 0
    %s13 = scalar_lea.sflag [#allocation9], 1
    %14 = vsyncpa %s13, 0
    %15 = vsyncpa [#allocation12], 0
    %16 = vsyncpa [#allocation15], 0
    %17 = vsyncpa [#allocation10], 0
    %s18 = scalar_lea.sflag [#allocation10], 1
    %19 = vsyncpa %s18, 0
    loop: start=0, step=1, limit=4
    $region2: #{tpu_custom_call.1} parent=1 // loop_pre_header
      _
    $region3: #{tpu_custom_call.1} parent=1 // loop_header
      %s21 = sphi 0, %s25
      %p22 = scmp.ge.s32.totalorder %s21, 4
      %s31 = sphi 0, %s33
      %s34 = sphi 0, %s31
      %s35 = sphi 0, %s34
      %s51 = sphi 0, %s35
      %s55 = sphi 0, %s55
      %s57 = sphi 0, %s55
      %s58 = sphi 0, %s57
      %s72 = sphi 0, %s58
      %s76 = sphi 0, %s76
      %s78 = sphi 0, %s76
      %s79 = sphi 0, %s78
      %s93 = sphi 0, %s79
      %s97 = sphi 0, %s97
      %s99 = sphi 0, %s97
      %s100 = sphi 0, %s99
      %s114 = sphi 0, %s100
      %s118 = sphi 0, %s118
      %s120 = sphi 0, %s118
      %s121 = sphi 0, %s120
      %s135 = sphi 0, %s121
      %s139 = sphi 0, %s139
      %s141 = sphi 0, %s139
      %s142 = sphi 0, %s141
      %s156 = sphi 0, %s142
      %s160 = sphi 0, %s160
      %s162 = sphi 0, %s160
      %s163 = sphi 0, %s162
      %s177 = sphi 0, %s163
      %s183 = sphi 0, %s185
      %s186 = sphi 0, %s183
      %s187 = sphi 0, %s186
      %s203 = sphi 0, %s187
    $region4: #{tpu_custom_call.1} parent=1 // loop_header_branch
      %24 = sbr.rel (%p22) target = $region8
    $region5: #{tpu_custom_call.1} parent=1 // loop_body
      %s26 = ssub.s32 %s21, 1
      %s27 = ssub.s32 %s21, 2
      %s28 = sadd.s32 %s21, 1
      %s29 = ssub.s32 %s21, %s28
      %p30 = scmp.eq.s32.totalorder %s29, 0
      %s32 = sadd.s32 %s31, 1
      %s33 = scalar_select %p30, %s31, %s32
      %p36 = pneg %p30
      %p37 = scmp.eq.s32.totalorder %s21, 1
      %p38 = por %p36, %p37
      %p39 = scmp.ne.s32.totalorder %s31, %s34
      %p40 = scmp.eq.s32.totalorder %s21, 0
      %p41 = por %p39, %p40
      %p42 = scmp.ne.s32.totalorder %s31, %s34
      %p43 = scmp.eq.s32.totalorder %s26, 1
      %p44 = por %p42, %p43
      %p45 = scmp.ne.s32.totalorder %s34, %s35
      %p46 = scmp.eq.s32.totalorder %s26, 0
      %p47 = por %p45, %p46
      %p48 = scmp.ne.s32.totalorder %s34, %s35
      %p49 = scmp.eq.s32.totalorder %s27, 1
      %p50 = por %p48, %p49
      %p52 = scmp.ne.s32.totalorder %s35, %s51
      %p53 = scmp.eq.s32.totalorder %s27, 0
      %p54 = por %p52, %p53
      %s56 = sadd.s32 %s55, 1
      %p59 = scmp.eq.s32.totalorder %s21, 1
      %p60 = scmp.ne.s32.totalorder %s55, %s57
      %p61 = scmp.eq.s32.totalorder %s21, 0
      %p62 = por %p60, %p61
      %p63 = scmp.ne.s32.totalorder %s55, %s57
      %p64 = scmp.eq.s32.totalorder %s26, 1
      %p65 = por %p63, %p64
      %p66 = scmp.ne.s32.totalorder %s57, %s58
      %p67 = scmp.eq.s32.totalorder %s26, 0
      %p68 = por %p66, %p67
      %p69 = scmp.ne.s32.totalorder %s57, %s58
      %p70 = scmp.eq.s32.totalorder %s27, 1
      %p71 = por %p69, %p70
      %p73 = scmp.ne.s32.totalorder %s58, %s72
      %p74 = scmp.eq.s32.totalorder %s27, 0
      %p75 = por %p73, %p74
      %s77 = sadd.s32 %s76, 1
      %p80 = scmp.eq.s32.totalorder %s21, 1
      %p81 = scmp.ne.s32.totalorder %s76, %s78
      %p82 = scmp.eq.s32.totalorder %s21, 0
      %p83 = por %p81, %p82
      %p84 = scmp.ne.s32.totalorder %s76, %s78
      %p85 = scmp.eq.s32.totalorder %s26, 1
      %p86 = por %p84, %p85
      %p87 = scmp.ne.s32.totalorder %s78, %s79
      %p88 = scmp.eq.s32.totalorder %s26, 0
      %p89 = por %p87, %p88
      %p90 = scmp.ne.s32.totalorder %s78, %s79
      %p91 = scmp.eq.s32.totalorder %s27, 1
      %p92 = por %p90, %p91
      %p94 = scmp.ne.s32.totalorder %s79, %s93
      %p95 = scmp.eq.s32.totalorder %s27, 0
      %p96 = por %p94, %p95
      %s98 = sadd.s32 %s97, 1
      %p101 = scmp.eq.s32.totalorder %s21, 1
      %p102 = scmp.ne.s32.totalorder %s97, %s99
      %p103 = scmp.eq.s32.totalorder %s21, 0
      %p104 = por %p102, %p103
      %p105 = scmp.ne.s32.totalorder %s97, %s99
      %p106 = scmp.eq.s32.totalorder %s26, 1
      %p107 = por %p105, %p106
      %p108 = scmp.ne.s32.totalorder %s99, %s100
      %p109 = scmp.eq.s32.totalorder %s26, 0
      %p110 = por %p108, %p109
      %p111 = scmp.ne.s32.totalorder %s99, %s100
      %p112 = scmp.eq.s32.totalorder %s27, 1
      %p113 = por %p111, %p112
      %p115 = scmp.ne.s32.totalorder %s100, %s114
      %p116 = scmp.eq.s32.totalorder %s27, 0
      %p117 = por %p115, %p116
      %s119 = sadd.s32 %s118, 1
      %p122 = scmp.eq.s32.totalorder %s21, 1
      %p123 = scmp.ne.s32.totalorder %s118, %s120
      %p124 = scmp.eq.s32.totalorder %s21, 0
      %p125 = por %p123, %p124
      %p126 = scmp.ne.s32.totalorder %s118, %s120
      %p127 = scmp.eq.s32.totalorder %s26, 1
      %p128 = por %p126, %p127
      %p129 = scmp.ne.s32.totalorder %s120, %s121
      %p130 = scmp.eq.s32.totalorder %s26, 0
      %p131 = por %p129, %p130
      %p132 = scmp.ne.s32.totalorder %s120, %s121
      %p133 = scmp.eq.s32.totalorder %s27, 1
      %p134 = por %p132, %p133
      %p136 = scmp.ne.s32.totalorder %s121, %s135
      %p137 = scmp.eq.s32.totalorder %s27, 0
      %p138 = por %p136, %p137
      %s140 = sadd.s32 %s139, 1
      %p143 = scmp.eq.s32.totalorder %s21, 1
      %p144 = scmp.ne.s32.totalorder %s139, %s141
      %p145 = scmp.eq.s32.totalorder %s21, 0
      %p146 = por %p144, %p145
      %p147 = scmp.ne.s32.totalorder %s139, %s141
      %p148 = scmp.eq.s32.totalorder %s26, 1
      %p149 = por %p147, %p148
      %p150 = scmp.ne.s32.totalorder %s141, %s142
      %p151 = scmp.eq.s32.totalorder %s26, 0
      %p152 = por %p150, %p151
      %p153 = scmp.ne.s32.totalorder %s141, %s142
      %p154 = scmp.eq.s32.totalorder %s27, 1
      %p155 = por %p153, %p154
      %p157 = scmp.ne.s32.totalorder %s142, %s156
      %p158 = scmp.eq.s32.totalorder %s27, 0
      %p159 = por %p157, %p158
      %s161 = sadd.s32 %s160, 1
      %p164 = scmp.eq.s32.totalorder %s21, 1
      %p165 = scmp.ne.s32.totalorder %s160, %s162
      %p166 = scmp.eq.s32.totalorder %s21, 0
      %p167 = por %p165, %p166
      %p168 = scmp.ne.s32.totalorder %s160, %s162
      %p169 = scmp.eq.s32.totalorder %s26, 1
      %p170 = por %p168, %p169
      %p171 = scmp.ne.s32.totalorder %s162, %s163
      %p172 = scmp.eq.s32.totalorder %s26, 0
      %p173 = por %p171, %p172
      %p174 = scmp.ne.s32.totalorder %s162, %s163
      %p175 = scmp.eq.s32.totalorder %s27, 1
      %p176 = por %p174, %p175
      %p178 = scmp.ne.s32.totalorder %s163, %s177
      %p179 = scmp.eq.s32.totalorder %s27, 0
      %p180 = por %p178, %p179
      %s181 = ssub.s32 %s21, %s28
      %p182 = scmp.eq.s32.totalorder %s181, 0
      %s184 = sadd.s32 %s183, 1
      %s185 = scalar_select %p182, %s183, %s184
      %p188 = pneg %p182
      %p189 = scmp.eq.s32.totalorder %s21, 1
      %p190 = por %p188, %p189
      %p191 = scmp.ne.s32.totalorder %s183, %s186
      %p192 = scmp.eq.s32.totalorder %s21, 0
      %p193 = por %p191, %p192
      %p194 = scmp.ne.s32.totalorder %s183, %s186
      %p195 = scmp.eq.s32.totalorder %s26, 1
      %p196 = por %p194, %p195
      %p197 = scmp.ne.s32.totalorder %s186, %s187
      %p198 = scmp.eq.s32.totalorder %s26, 0
      %p199 = por %p197, %p198
      %p200 = scmp.ne.s32.totalorder %s186, %s187
      %p201 = scmp.eq.s32.totalorder %s27, 1
      %p202 = por %p200, %p201
      %p204 = scmp.ne.s32.totalorder %s187, %s203
      %p205 = scmp.eq.s32.totalorder %s27, 0
      %p206 = por %p204, %p205
      %p207 = scmp.le.s32.totalorder 1, %s21
      %p208 = scmp.lt.s32.totalorder %s21, 3
      %p209 = pnand %p207, %p208
      %p210 = pneg %p209
      // Predicated region
      $region9: #{tpu_custom_call.1} parent=5 // pred_check
        _
      $region10: #{tpu_custom_call.1} parent=5 // pred_check_branch
        %212 = sbr.rel (%p209) target = $region12
      $region11: #{tpu_custom_call.1} parent=5 // pred_region
        %s213 = ssub.s32 %s21, 1
        // Predicated region
        $region13: #{tpu_custom_call.1} parent=11 // pred_check
          %p214 = pneg %p68
        $region14: #{tpu_custom_call.1} parent=11 // pred_check_branch
          %216 = sbr.rel (%p214) target = $region16
        $region15: #{tpu_custom_call.1} parent=11 // pred_region
          %s218 = ssub.s32 512, 512
          %219 = vsyncadd [#allocation12], %s218
          %s220 = sshll.u32 [#allocation11], 4
          %s221 = int_to_ptr.vmem [resolvable:$true] %s220
          %226 = dma.hbm_to_vmem [thread:$0]  %s1, 512, %s221, [#allocation12], 128, 128, 8
        $region16: #{tpu_custom_call.1} parent=11 // pred_fallthru
          _
        // Predicated region
        $region17: #{tpu_custom_call.1} parent=11 // pred_check
          %p227 = pneg %p89
        $region18: #{tpu_custom_call.1} parent=11 // pred_check_branch
          %229 = sbr.rel (%p227) target = $region20
        $region19: #{tpu_custom_call.1} parent=11 // pred_region
          %s231 = ssub.s32 512, 512
          %232 = vsyncadd [#allocation12], %s231
          %s233 = sshll.u32 [#allocation13], 4
          %s234 = int_to_ptr.vmem [resolvable:$true] %s233
          %239 = dma.hbm_to_vmem [thread:$0]  %s2, 512, %s234, [#allocation12], 128, 128, 8
        $region20: #{tpu_custom_call.1} parent=11 // pred_fallthru
          _
        // Predicated region
        $region21: #{tpu_custom_call.1} parent=11 // pred_check
          %p240 = pneg %p110
        $region22: #{tpu_custom_call.1} parent=11 // pred_check_branch
          %242 = sbr.rel (%p240) target = $region24
        $region23: #{tpu_custom_call.1} parent=11 // pred_region
          _
        $region24: #{tpu_custom_call.1} parent=11 // pred_fallthru
          _
        // Predicated region
        $region25: #{tpu_custom_call.1} parent=11 // pred_check
          %p243 = pneg %p131
        $region26: #{tpu_custom_call.1} parent=11 // pred_check_branch
          %245 = sbr.rel (%p243) target = $region28
        $region27: #{tpu_custom_call.1} parent=11 // pred_region
          %s247 = ssub.s32 512, 512
          %248 = vsyncadd [#allocation15], %s247
          %s249 = sshll.u32 [#allocation14], 4
          %s250 = int_to_ptr.vmem [resolvable:$true] %s249
          %255 = dma.hbm_to_vmem [thread:$0]  %s4, 512, %s250, [#allocation15], 128, 128, 8
        $region28: #{tpu_custom_call.1} parent=11 // pred_fallthru
          _
        // Predicated region
        $region29: #{tpu_custom_call.1} parent=11 // pred_check
          %p256 = pneg %p152
        $region30: #{tpu_custom_call.1} parent=11 // pred_check_branch
          %258 = sbr.rel (%p256) target = $region32
        $region31: #{tpu_custom_call.1} parent=11 // pred_region
          %s260 = ssub.s32 512, 512
          %261 = vsyncadd [#allocation15], %s260
          %s262 = sshll.u32 [#allocation16], 4
          %s263 = int_to_ptr.vmem [resolvable:$true] %s262
          %268 = dma.hbm_to_vmem [thread:$0]  %s5, 512, %s263, [#allocation15], 128, 128, 8
        $region32: #{tpu_custom_call.1} parent=11 // pred_fallthru
          _
        // Predicated region
        $region33: #{tpu_custom_call.1} parent=11 // pred_check
          %p269 = pneg %p173
        $region34: #{tpu_custom_call.1} parent=11 // pred_check_branch
          %271 = sbr.rel (%p269) target = $region36
        $region35: #{tpu_custom_call.1} parent=11 // pred_region
          _
        $region36: #{tpu_custom_call.1} parent=11 // pred_fallthru
          _
      $region12: #{tpu_custom_call.1} parent=5 // pred_fallthru
        _
      %p272 = scmp.lt.s32.totalorder %s21, 2
      // Predicated region
      $region37: #{tpu_custom_call.1} parent=5 // pred_check
        %p273 = pneg %p272
      $region38: #{tpu_custom_call.1} parent=5 // pred_check_branch
        %275 = sbr.rel (%p273) target = $region40
      $region39: #{tpu_custom_call.1} parent=5 // pred_region
        // Predicated region
        $region41: #{tpu_custom_call.1} parent=39 // pred_check
          %p276 = pneg %p41
        $region42: #{tpu_custom_call.1} parent=39 // pred_check_branch
          %278 = sbr.rel (%p276) target = $region44
        $region43: #{tpu_custom_call.1} parent=39 // pred_region
          %s279 = sand.u32 %s31, 1
          %s280 = scalar_lea.sflag [#allocation9], %s279
          %s281 = sand.u32 %s31, 1
          %s282 = smul.addr %s281, 8
          %s283 = scalar_lea.vmem [#allocation8], %s282
          %s285 = ssub.s32 128, 128
          %286 = vsyncadd %s280, %s285
          %s287 = smul.addr %s21, 128
          %s288 = scalar_lea.hbm %s0, %s287
          %s290 = sshll.u32 %s283, 4
          %s291 = int_to_ptr.vmem [resolvable:$true] %s290
          %293 = dma.hbm_to_vmem [thread:$0]  %s288, 128, %s291, %s280
        $region44: #{tpu_custom_call.1} parent=39 // pred_fallthru
          _
      $region40: #{tpu_custom_call.1} parent=5 // pred_fallthru
        _
      %p294 = scmp.le.s32.totalorder 1, %s21
      %p295 = scmp.lt.s32.totalorder %s21, 3
      %p296 = pnand %p294, %p295
      %p297 = pneg %p296
      // Predicated region
      $region45: #{tpu_custom_call.1} parent=5 // pred_check
        _
      $region46: #{tpu_custom_call.1} parent=5 // pred_check_branch
        %299 = sbr.rel (%p296) target = $region48
      $region47: #{tpu_custom_call.1} parent=5 // pred_region
        %s300 = ssub.s32 %s21, 1
        %s301 = sand.u32 %s34, 1
        %s302 = scalar_lea.sflag [#allocation9], %s301
        %s303 = sand.u32 %s34, 1
        %s304 = smul.addr %s303, 8
        %s305 = scalar_lea.vmem [#allocation8], %s304
        // Predicated region
        $region49: #{tpu_custom_call.1} parent=47 // pred_check
          %p306 = pneg %p47
        $region50: #{tpu_custom_call.1} parent=47 // pred_check_branch
          %308 = sbr.rel (%p306) target = $region52
        $region51: #{tpu_custom_call.1} parent=47 // pred_region
          %309 = dma.done %s302, 128
        $region52: #{tpu_custom_call.1} parent=47 // pred_fallthru
          _
        // Predicated region
        $region53: #{tpu_custom_call.1} parent=47 // pred_check
          %p310 = pneg %p68
        $region54: #{tpu_custom_call.1} parent=47 // pred_check_branch
          %312 = sbr.rel (%p310) target = $region56
        $region55: #{tpu_custom_call.1} parent=47 // pred_region
          %313 = dma.done [#allocation12], 512
        $region56: #{tpu_custom_call.1} parent=47 // pred_fallthru
          _
        // Predicated region
        $region57: #{tpu_custom_call.1} parent=47 // pred_check
          %p314 = pneg %p89
        $region58: #{tpu_custom_call.1} parent=47 // pred_check_branch
          %316 = sbr.rel (%p314) target = $region60
        $region59: #{tpu_custom_call.1} parent=47 // pred_region
          %317 = dma.done [#allocation12], 512
        $region60: #{tpu_custom_call.1} parent=47 // pred_fallthru
          _
        // Predicated region
        $region61: #{tpu_custom_call.1} parent=47 // pred_check
          %p318 = pneg %p131
        $region62: #{tpu_custom_call.1} parent=47 // pred_check_branch
          %320 = sbr.rel (%p318) target = $region64
        $region63: #{tpu_custom_call.1} parent=47 // pred_region
          %321 = dma.done [#allocation15], 512
        $region64: #{tpu_custom_call.1} parent=47 // pred_fallthru
          _
        // Predicated region
        $region65: #{tpu_custom_call.1} parent=47 // pred_check
          %p322 = pneg %p152
        $region66: #{tpu_custom_call.1} parent=47 // pred_check_branch
          %324 = sbr.rel (%p322) target = $region68
        $region67: #{tpu_custom_call.1} parent=47 // pred_region
          %325 = dma.done [#allocation15], 512
        $region68: #{tpu_custom_call.1} parent=47 // pred_fallthru
          _
        %s326 = sand.u32 %s34, 1
        %s327 = scalar_lea.sflag [#allocation9], %s326
        %s328 = sand.u32 %s34, 1
        %s329 = smul.addr %s328, 8
        %s330 = scalar_lea.vmem [#allocation8], %s329
        %p331 = pneg %p47
        %p332 = pneg %p44
        %p333 = pneg %p68
        %p334 = pneg %p65
        %p335 = pneg %p89
        %p336 = pneg %p86
        %p337 = pneg %p110
        %p338 = pneg %p107
        %p339 = pneg %p131
        %p340 = pneg %p128
        %p341 = pneg %p152
        %p342 = pneg %p149
        %p343 = pneg %p173
        %p344 = pneg %p170
        %p345 = pneg %p199
        %p346 = pneg %p196
        %s347 = sand.u32 %s186, 1
        %s348 = scalar_lea.sflag [#allocation10], %s347
        %s349 = sand.u32 %s186, 1
        %s350 = smul.addr %s349, 8
        %s351 = scalar_lea.vmem [#allocation17], %s350
        %p352 = scmp.eq.s32.totalorder %s26, 0
        // Predicated region
        $region69: #{tpu_custom_call.1} parent=47 // pred_check
          %p353 = pneg %p352
        $region70: #{tpu_custom_call.1} parent=47 // pred_check_branch
          %355 = sbr.rel (%p353) target = $region72
        $region71: #{tpu_custom_call.1} parent=47 // pred_region
          %vm356 = vcmask 254976
          %357 = vst.msk [vmem:[#allocation4] sm:$0x3] %vm356, 0.0
          %358 = vst.msk [vmem:[#allocation5] sm:$0x3] %vm356, 0.0
          %359 = vst.msk [vmem:[#allocation6] sm:$0x3] %vm356, 0.0
          %360 = vst.msk [vmem:[#allocation7] sm:$0x3] %vm356, 0.0
        $region72: #{tpu_custom_call.1} parent=47 // pred_fallthru
          _
        %v361 = vld [vmem:[%s305] sm:$0xff]
        %v362 = vld [vmem:[#allocation11] sm:$0xff]
        %v363 = vld [vmem:[#allocation11 + $0x8] sm:$0xff]
        %v364 = vld [vmem:[#allocation11 + $0x10] sm:$0xff]
        %v365 = vld [vmem:[#allocation11 + $0x18] sm:$0xff]
        %v366 = vld [vmem:[%s3] sm:$0x1]
        %v368 = vlaneseq
        %v369 = vshrl.u32 %v368, 7
        %v370 = vsub.s32 0, %v369
        %v371 = vrot.slane %v366, %v370
        %vm373 = vcmask 261120
        %v375 = vsel %vm373, %v361, 0
        %377 = vmatprep.subr.mxu0 0.0
        %378 = vmatpush1.msra.mxu0 0.0
        %379 = vmatprep.subr.mxu0 0.0
        %380 = vmatpush1.msra.mxu0 0.0
        %381 = vmatprep.subr.mxu0 0.0
        %382 = vmatpush1.msra.mxu0 0.0
        %383 = vmatprep.subr.mxu0 0.0
        %384 = vmatpush1.msra.mxu0 0.0
        %385 = vmatprep.subr.mxu0 0.0
        %386 = vmatpush1.msra.mxu0 0.0
        %387 = vmatprep.subr.mxu0 0.0
        %388 = vmatpush1.msra.mxu0 0.0
        %389 = vmatprep.subr.mxu0 0.0
        %390 = vmatpush1.msra.mxu0 0.0
        %391 = vmatprep.subr.mxu0 0.0
        %392 = vmatpush1.msra.mxu0 0.0
        %393 = vmatprep.subr.mxu0 0.0
        %394 = vmatpush1.msra.mxu0 0.0
        %395 = vmatprep.subr.mxu0 0.0
        %396 = vmatpush1.msra.mxu0 0.0
        %397 = vmatprep.subr.mxu0 0.0
        %398 = vmatpush1.msra.mxu0 0.0
        %399 = vmatprep.subr.mxu0 0.0
        %400 = vmatpush1.msra.mxu0 0.0
        %401 = vmatprep.subr.mxu0 0.0
        %402 = vmatpush1.msra.mxu0 %v365
        %403 = vmatprep.subr.mxu0 0.0
        %404 = vmatpush1.msra.mxu0 %v364
        %405 = vmatprep.subr.mxu0 0.0
        %406 = vmatpush1.msra.mxu0 %v363
        %407 = vmatprep.subr.mxu0 0.0
        %408 = vmatpush1.msra.mxu0 %v362
        %409 = vmatprep.subr.mxu0 0.0
        %410 = vmatpush2.msra.mxu0 0.0
        %411 = vmatprep.subr.mxu0 0.0
        %412 = vmatpush2.msra.mxu0 0.0
        %413 = vmatprep.subr.mxu0 0.0
        %414 = vmatpush2.msra.mxu0 0.0
        %415 = vmatprep.subr.mxu0 0.0
        %416 = vmatpush2.msra.mxu0 0.0
        %417 = vmatprep.subr.mxu0 0.0
        %418 = vmatpush2.msra.mxu0 0.0
        %419 = vmatprep.subr.mxu0 0.0
        %420 = vmatpush2.msra.mxu0 0.0
        %421 = vmatprep.subr.mxu0 0.0
        %422 = vmatpush2.msra.mxu0 0.0
        %423 = vmatprep.subr.mxu0 0.0
        %424 = vmatpush2.msra.mxu0 0.0
        %425 = vmatprep.subr.mxu0 0.0
        %426 = vmatpush2.msra.mxu0 0.0
        %427 = vmatprep.subr.mxu0 0.0
        %428 = vmatpush2.msra.mxu0 0.0
        %429 = vmatprep.subr.mxu0 0.0
        %430 = vmatpush2.msra.mxu0 0.0
        %431 = vmatprep.subr.mxu0 0.0
        %432 = vmatpush2.msra.mxu0 0.0
        %433 = vmatprep.subr.mxu0 0.0
        %434 = vmatpush2.msra.mxu0 0.0
        %435 = vmatprep.subr.mxu0 0.0
        %436 = vmatpush2.msra.mxu0 0.0
        %437 = vmatprep.subr.mxu0 0.0
        %438 = vmatpush2.msra.mxu0 0.0
        %439 = vmatprep.subr.mxu0 0.0
        %440 = vmatpush2.msra.mxu0 0.0
        %441 = vmatprep.mubr.f32.mxu0 0.0
        %442 = vmatmul.mubr.f32.gmra.mxu0 %v375
        %v443 = vpop.f32.mrf.mxu0
        %v444 = vadd.f32 %v371, %v443
        %v445 = vpop.f32.mrf.mxu0
        %446 = vdwg.mxu0
        %447 = vst [vmem:[#allocation2] sm:$0xff] %v444
        %v448 = vld [vmem:[#allocation4] sm:$0x3]
        %v449 = vld [vmem:[#allocation5] sm:$0x3]
        %v450 = vld [vmem:[#allocation2] sm:$0x3]
        %v451 = vld [vmem:[#allocation13] sm:$0xff]
        %v452 = vld [vmem:[#allocation13 + $0x8] sm:$0xff]
        %v453 = vld [vmem:[#allocation13 + $0x10] sm:$0xff]
        %v454 = vld [vmem:[#allocation13 + $0x18] sm:$0xff]
        %v456 = vsel %vm373, %v448, 0
        %458 = vmatprep.subr.mxu0 0.0
        %459 = vmatpush1.msra.mxu0 0.0
        %460 = vmatprep.subr.mxu0 0.0
        %461 = vmatpush1.msra.mxu0 0.0
        %462 = vmatprep.subr.mxu0 0.0
        %463 = vmatpush1.msra.mxu0 0.0
        %464 = vmatprep.subr.mxu0 0.0
        %465 = vmatpush1.msra.mxu0 0.0
        %466 = vmatprep.subr.mxu0 0.0
        %467 = vmatpush1.msra.mxu0 0.0
        %468 = vmatprep.subr.mxu0 0.0
        %469 = vmatpush1.msra.mxu0 0.0
        %470 = vmatprep.subr.mxu0 0.0
        %471 = vmatpush1.msra.mxu0 0.0
        %472 = vmatprep.subr.mxu0 0.0
        %473 = vmatpush1.msra.mxu0 0.0
        %474 = vmatprep.subr.mxu0 0.0
        %475 = vmatpush1.msra.mxu0 0.0
        %476 = vmatprep.subr.mxu0 0.0
        %477 = vmatpush1.msra.mxu0 0.0
        %478 = vmatprep.subr.mxu0 0.0
        %479 = vmatpush1.msra.mxu0 0.0
        %480 = vmatprep.subr.mxu0 0.0
        %481 = vmatpush1.msra.mxu0 0.0
        %482 = vmatprep.subr.mxu0 0.0
        %483 = vmatpush1.msra.mxu0 %v454
        %484 = vmatprep.subr.mxu0 0.0
        %485 = vmatpush1.msra.mxu0 %v453
        %486 = vmatprep.subr.mxu0 0.0
        %487 = vmatpush1.msra.mxu0 %v452
        %488 = vmatprep.subr.mxu0 0.0
        %489 = vmatpush1.msra.mxu0 %v451
        %490 = vmatprep.subr.mxu0 0.0
        %491 = vmatpush2.msra.mxu0 0.0
        %492 = vmatprep.subr.mxu0 0.0
        %493 = vmatpush2.msra.mxu0 0.0
        %494 = vmatprep.subr.mxu0 0.0
        %495 = vmatpush2.msra.mxu0 0.0
        %496 = vmatprep.subr.mxu0 0.0
        %497 = vmatpush2.msra.mxu0 0.0
        %498 = vmatprep.subr.mxu0 0.0
        %499 = vmatpush2.msra.mxu0 0.0
        %500 = vmatprep.subr.mxu0 0.0
        %501 = vmatpush2.msra.mxu0 0.0
        %502 = vmatprep.subr.mxu0 0.0
        %503 = vmatpush2.msra.mxu0 0.0
        %504 = vmatprep.subr.mxu0 0.0
        %505 = vmatpush2.msra.mxu0 0.0
        %506 = vmatprep.subr.mxu0 0.0
        %507 = vmatpush2.msra.mxu0 0.0
        %508 = vmatprep.subr.mxu0 0.0
        %509 = vmatpush2.msra.mxu0 0.0
        %510 = vmatprep.subr.mxu0 0.0
        %511 = vmatpush2.msra.mxu0 0.0
        %512 = vmatprep.subr.mxu0 0.0
        %513 = vmatpush2.msra.mxu0 0.0
        %514 = vmatprep.subr.mxu0 0.0
        %515 = vmatpush2.msra.mxu0 0.0
        %516 = vmatprep.subr.mxu0 0.0
        %517 = vmatpush2.msra.mxu0 0.0
        %518 = vmatprep.subr.mxu0 0.0
        %519 = vmatpush2.msra.mxu0 0.0
        %520 = vmatprep.subr.mxu0 0.0
        %521 = vmatpush2.msra.mxu0 0.0
        %522 = vmatprep.mubr.f32.mxu0 0.0
        %523 = vmatmul.mubr.f32.gmra.mxu0 %v456
        %v524 = vpop.f32.mrf.mxu0
        %v525 = vadd.f32 0.0, %v524
        %v526 = vpop.f32.mrf.mxu0
        %527 = vdwg.mxu0
        %v528 = vadd.f32 %v450, %v525
        %v529 = vxor.u32 %v528, 2147483648
        %v530 = vmul.f32 %v529, 1.442695
        %v531 = vpow.pop %v530
        %v532 = vadd.f32 %v531, 1.0
        %v533 = vrcp.pop %v532
        %v534 = vmul.f32 1.0, %v533
        %v535 = vtanh.pop %v528
        %537 = vrot.lane.b32.xlu0 %v449, 32
        %v538 = vpop.permute.xlu0 %537
        %v540 = vmul.f32 %v534, %v538
        %542 = vrot.lane.b32.xlu0 %v535, 64
        %v543 = vpop.permute.xlu0 %542
        %v545 = vmul.f32 %v534, %v543
        %547 = vrot.lane.b32.xlu0 %v545, 32
        %v548 = vpop.permute.xlu0 %547
        %v550 = vadd.f32 %v540, %v548
        %v551 = vtanh.pop %v550
        %553 = vrot.lane.b32.xlu0 %v551, 64
        %v554 = vpop.permute.xlu0 %553
        %v556 = vmul.f32 %v534, %v554
        %558 = vrot.lane.b32.xlu0 %v556, 32
        %v559 = vpop.permute.xlu0 %558
        %vm561 = vcmask 254976
        %562 = vst.msk [vmem:[#allocation3] sm:$0x3] %vm561, %v559
        %s563 = scalar_lea.vmem [#allocation2], 2
        %v564 = vld [vmem:[%s563] sm:$0x3]
        %v565 = vld [vmem:[#allocation13] sm:$0xff]
        %v566 = vld [vmem:[#allocation13 + $0x8] sm:$0xff]
        %v567 = vld [vmem:[#allocation13 + $0x10] sm:$0xff]
        %v568 = vld [vmem:[#allocation13 + $0x18] sm:$0xff]
        %v569 = vsel %vm373, %v559, 0
        %571 = vmatprep.subr.mxu0 0.0
        %572 = vmatpush1.msra.mxu0 0.0
        %573 = vmatprep.subr.mxu0 0.0
        %574 = vmatpush1.msra.mxu0 0.0
        %575 = vmatprep.subr.mxu0 0.0
        %576 = vmatpush1.msra.mxu0 0.0
        %577 = vmatprep.subr.mxu0 0.0
        %578 = vmatpush1.msra.mxu0 0.0
        %579 = vmatprep.subr.mxu0 0.0
        %580 = vmatpush1.msra.mxu0 0.0
        %581 = vmatprep.subr.mxu0 0.0
        %582 = vmatpush1.msra.mxu0 0.0
        %583 = vmatprep.subr.mxu0 0.0
        %584 = vmatpush1.msra.mxu0 0.0
        %585 = vmatprep.subr.mxu0 0.0
        %586 = vmatpush1.msra.mxu0 0.0
        %587 = vmatprep.subr.mxu0 0.0
        %588 = vmatpush1.msra.mxu0 0.0
        %589 = vmatprep.subr.mxu0 0.0
        %590 = vmatpush1.msra.mxu0 0.0
        %591 = vmatprep.subr.mxu0 0.0
        %592 = vmatpush1.msra.mxu0 0.0
        %593 = vmatprep.subr.mxu0 0.0
        %594 = vmatpush1.msra.mxu0 0.0
        %595 = vmatprep.subr.mxu0 0.0
        %596 = vmatpush1.msra.mxu0 %v568
        %597 = vmatprep.subr.mxu0 0.0
        %598 = vmatpush1.msra.mxu0 %v567
        %599 = vmatprep.subr.mxu0 0.0
        %600 = vmatpush1.msra.mxu0 %v566
        %601 = vmatprep.subr.mxu0 0.0
        %602 = vmatpush1.msra.mxu0 %v565
        %603 = vmatprep.subr.mxu0 0.0
        %604 = vmatpush2.msra.mxu0 0.0
        %605 = vmatprep.subr.mxu0 0.0
        %606 = vmatpush2.msra.mxu0 0.0
        %607 = vmatprep.subr.mxu0 0.0
        %608 = vmatpush2.msra.mxu0 0.0
        %609 = vmatprep.subr.mxu0 0.0
        %610 = vmatpush2.msra.mxu0 0.0
        %611 = vmatprep.subr.mxu0 0.0
        %612 = vmatpush2.msra.mxu0 0.0
        %613 = vmatprep.subr.mxu0 0.0
        %614 = vmatpush2.msra.mxu0 0.0
        %615 = vmatprep.subr.mxu0 0.0
        %616 = vmatpush2.msra.mxu0 0.0
        %617 = vmatprep.subr.mxu0 0.0
        %618 = vmatpush2.msra.mxu0 0.0
        %619 = vmatprep.subr.mxu0 0.0
        %620 = vmatpush2.msra.mxu0 0.0
        %621 = vmatprep.subr.mxu0 0.0
        %622 = vmatpush2.msra.mxu0 0.0
        %623 = vmatprep.subr.mxu0 0.0
        %624 = vmatpush2.msra.mxu0 0.0
        %625 = vmatprep.subr.mxu0 0.0
        %626 = vmatpush2.msra.mxu0 0.0
        %627 = vmatprep.subr.mxu0 0.0
        %628 = vmatpush2.msra.mxu0 0.0
        %629 = vmatprep.subr.mxu0 0.0
        %630 = vmatpush2.msra.mxu0 0.0
        %631 = vmatprep.subr.mxu0 0.0
        %632 = vmatpush2.msra.mxu0 0.0
        %633 = vmatprep.subr.mxu0 0.0
        %634 = vmatpush2.msra.mxu0 0.0
        %635 = vmatprep.mubr.f32.mxu0 0.0
        %636 = vmatmul.mubr.f32.gmra.mxu0 %v569
        %v637 = vpop.f32.mrf.mxu0
        %v638 = vadd.f32 0.0, %v637
        %v639 = vpop.f32.mrf.mxu0
        %640 = vdwg.mxu0
        %v641 = vadd.f32 %v564, %v638
        %v642 = vxor.u32 %v641, 2147483648
        %v643 = vmul.f32 %v642, 1.442695
        %v644 = vpow.pop %v643
        %v645 = vadd.f32 %v644, 1.0
        %v646 = vrcp.pop %v645
        %v647 = vmul.f32 1.0, %v646
        %v648 = vtanh.pop %v641
        %v649 = vmul.f32 %v647, %v550
        %651 = vrot.lane.b32.xlu0 %v648, 64
        %v652 = vpop.permute.xlu0 %651
        %v654 = vmul.f32 %v647, %v652
        %656 = vrot.lane.b32.xlu0 %v654, 32
        %v657 = vpop.permute.xlu0 %656
        %v659 = vadd.f32 %v649, %v657
        %v660 = vtanh.pop %v659
        %662 = vrot.lane.b32.xlu0 %v660, 64
        %v663 = vpop.permute.xlu0 %662
        %v665 = vmul.f32 %v647, %v663
        %667 = vrot.lane.b32.xlu0 %v665, 32
        %v668 = vpop.permute.xlu0 %667
        %s670 = scalar_lea.vmem [#allocation3], 2
        %671 = vst.msk [vmem:[%s670] sm:$0x3] %vm561, %v668
        %s672 = scalar_lea.vmem [#allocation2], 4
        %v673 = vld [vmem:[%s672] sm:$0x3]
        %v674 = vld [vmem:[#allocation13] sm:$0xff]
        %v675 = vld [vmem:[#allocation13 + $0x8] sm:$0xff]
        %v676 = vld [vmem:[#allocation13 + $0x10] sm:$0xff]
        %v677 = vld [vmem:[#allocation13 + $0x18] sm:$0xff]
        %v678 = vsel %vm373, %v668, 0
        %680 = vmatprep.subr.mxu0 0.0
        %681 = vmatpush1.msra.mxu0 0.0
        %682 = vmatprep.subr.mxu0 0.0
        %683 = vmatpush1.msra.mxu0 0.0
        %684 = vmatprep.subr.mxu0 0.0
        %685 = vmatpush1.msra.mxu0 0.0
        %686 = vmatprep.subr.mxu0 0.0
        %687 = vmatpush1.msra.mxu0 0.0
        %688 = vmatprep.subr.mxu0 0.0
        %689 = vmatpush1.msra.mxu0 0.0
        %690 = vmatprep.subr.mxu0 0.0
        %691 = vmatpush1.msra.mxu0 0.0
        %692 = vmatprep.subr.mxu0 0.0
        %693 = vmatpush1.msra.mxu0 0.0
        %694 = vmatprep.subr.mxu0 0.0
        %695 = vmatpush1.msra.mxu0 0.0
        %696 = vmatprep.subr.mxu0 0.0
        %697 = vmatpush1.msra.mxu0 0.0
        %698 = vmatprep.subr.mxu0 0.0
        %699 = vmatpush1.msra.mxu0 0.0
        %700 = vmatprep.subr.mxu0 0.0
        %701 = vmatpush1.msra.mxu0 0.0
        %702 = vmatprep.subr.mxu0 0.0
        %703 = vmatpush1.msra.mxu0 0.0
        %704 = vmatprep.subr.mxu0 0.0
        %705 = vmatpush1.msra.mxu0 %v677
        %706 = vmatprep.subr.mxu0 0.0
        %707 = vmatpush1.msra.mxu0 %v676
        %708 = vmatprep.subr.mxu0 0.0
        %709 = vmatpush1.msra.mxu0 %v675
        %710 = vmatprep.subr.mxu0 0.0
        %711 = vmatpush1.msra.mxu0 %v674
        %712 = vmatprep.subr.mxu0 0.0
        %713 = vmatpush2.msra.mxu0 0.0
        %714 = vmatprep.subr.mxu0 0.0
        %715 = vmatpush2.msra.mxu0 0.0
        %716 = vmatprep.subr.mxu0 0.0
        %717 = vmatpush2.msra.mxu0 0.0
        %718 = vmatprep.subr.mxu0 0.0
        %719 = vmatpush2.msra.mxu0 0.0
        %720 = vmatprep.subr.mxu0 0.0
        %721 = vmatpush2.msra.mxu0 0.0
        %722 = vmatprep.subr.mxu0 0.0
        %723 = vmatpush2.msra.mxu0 0.0
        %724 = vmatprep.subr.mxu0 0.0
        %725 = vmatpush2.msra.mxu0 0.0
        %726 = vmatprep.subr.mxu0 0.0
        %727 = vmatpush2.msra.mxu0 0.0
        %728 = vmatprep.subr.mxu0 0.0
        %729 = vmatpush2.msra.mxu0 0.0
        %730 = vmatprep.subr.mxu0 0.0
        %731 = vmatpush2.msra.mxu0 0.0
        %732 = vmatprep.subr.mxu0 0.0
        %733 = vmatpush2.msra.mxu0 0.0
        %734 = vmatprep.subr.mxu0 0.0
        %735 = vmatpush2.msra.mxu0 0.0
        %736 = vmatprep.subr.mxu0 0.0
        %737 = vmatpush2.msra.mxu0 0.0
        %738 = vmatprep.subr.mxu0 0.0
        %739 = vmatpush2.msra.mxu0 0.0
        %740 = vmatprep.subr.mxu0 0.0
        %741 = vmatpush2.msra.mxu0 0.0
        %742 = vmatprep.subr.mxu0 0.0
        %743 = vmatpush2.msra.mxu0 0.0
        %744 = vmatprep.mubr.f32.mxu0 0.0
        %745 = vmatmul.mubr.f32.gmra.mxu0 %v678
        %v746 = vpop.f32.mrf.mxu0
        %v747 = vadd.f32 0.0, %v746
        %v748 = vpop.f32.mrf.mxu0
        %749 = vdwg.mxu0
        %v750 = vadd.f32 %v673, %v747
        %v751 = vxor.u32 %v750, 2147483648
        %v752 = vmul.f32 %v751, 1.442695
        %v753 = vpow.pop %v752
        %v754 = vadd.f32 %v753, 1.0
        %v755 = vrcp.pop %v754
        %v756 = vmul.f32 1.0, %v755
        %v757 = vtanh.pop %v750
        %v758 = vmul.f32 %v756, %v659
        %760 = vrot.lane.b32.xlu0 %v757, 64
        %v761 = vpop.permute.xlu0 %760
        %v763 = vmul.f32 %v756, %v761
        %765 = vrot.lane.b32.xlu0 %v763, 32
        %v766 = vpop.permute.xlu0 %765
        %v768 = vadd.f32 %v758, %v766
        %v769 = vtanh.pop %v768
        %771 = vrot.lane.b32.xlu0 %v769, 64
        %v772 = vpop.permute.xlu0 %771
        %v774 = vmul.f32 %v756, %v772
        %776 = vrot.lane.b32.xlu0 %v774, 32
        %v777 = vpop.permute.xlu0 %776
        %s779 = scalar_lea.vmem [#allocation3], 4
        %780 = vst.msk [vmem:[%s779] sm:$0x3] %vm561, %v777
        %s781 = scalar_lea.vmem [#allocation2], 6
        %v782 = vld [vmem:[%s781] sm:$0x3]
        %v783 = vld [vmem:[#allocation13] sm:$0xff]
        %v784 = vld [vmem:[#allocation13 + $0x8] sm:$0xff]
        %v785 = vld [vmem:[#allocation13 + $0x10] sm:$0xff]
        %v786 = vld [vmem:[#allocation13 + $0x18] sm:$0xff]
        %v787 = vsel %vm373, %v777, 0
        %789 = vmatprep.subr.mxu0 0.0
        %790 = vmatpush1.msra.mxu0 0.0
        %791 = vmatprep.subr.mxu0 0.0
        %792 = vmatpush1.msra.mxu0 0.0
        %793 = vmatprep.subr.mxu0 0.0
        %794 = vmatpush1.msra.mxu0 0.0
        %795 = vmatprep.subr.mxu0 0.0
        %796 = vmatpush1.msra.mxu0 0.0
        %797 = vmatprep.subr.mxu0 0.0
        %798 = vmatpush1.msra.mxu0 0.0
        %799 = vmatprep.subr.mxu0 0.0
        %800 = vmatpush1.msra.mxu0 0.0
        %801 = vmatprep.subr.mxu0 0.0
        %802 = vmatpush1.msra.mxu0 0.0
        %803 = vmatprep.subr.mxu0 0.0
        %804 = vmatpush1.msra.mxu0 0.0
        %805 = vmatprep.subr.mxu0 0.0
        %806 = vmatpush1.msra.mxu0 0.0
        %807 = vmatprep.subr.mxu0 0.0
        %808 = vmatpush1.msra.mxu0 0.0
        %809 = vmatprep.subr.mxu0 0.0
        %810 = vmatpush1.msra.mxu0 0.0
        %811 = vmatprep.subr.mxu0 0.0
        %812 = vmatpush1.msra.mxu0 0.0
        %813 = vmatprep.subr.mxu0 0.0
        %814 = vmatpush1.msra.mxu0 %v786
        %815 = vmatprep.subr.mxu0 0.0
        %816 = vmatpush1.msra.mxu0 %v785
        %817 = vmatprep.subr.mxu0 0.0
        %818 = vmatpush1.msra.mxu0 %v784
        %819 = vmatprep.subr.mxu0 0.0
        %820 = vmatpush1.msra.mxu0 %v783
        %821 = vmatprep.subr.mxu0 0.0
        %822 = vmatpush2.msra.mxu0 0.0
        %823 = vmatprep.subr.mxu0 0.0
        %824 = vmatpush2.msra.mxu0 0.0
        %825 = vmatprep.subr.mxu0 0.0
        %826 = vmatpush2.msra.mxu0 0.0
        %827 = vmatprep.subr.mxu0 0.0
        %828 = vmatpush2.msra.mxu0 0.0
        %829 = vmatprep.subr.mxu0 0.0
        %830 = vmatpush2.msra.mxu0 0.0
        %831 = vmatprep.subr.mxu0 0.0
        %832 = vmatpush2.msra.mxu0 0.0
        %833 = vmatprep.subr.mxu0 0.0
        %834 = vmatpush2.msra.mxu0 0.0
        %835 = vmatprep.subr.mxu0 0.0
        %836 = vmatpush2.msra.mxu0 0.0
        %837 = vmatprep.subr.mxu0 0.0
        %838 = vmatpush2.msra.mxu0 0.0
        %839 = vmatprep.subr.mxu0 0.0
        %840 = vmatpush2.msra.mxu0 0.0
        %841 = vmatprep.subr.mxu0 0.0
        %842 = vmatpush2.msra.mxu0 0.0
        %843 = vmatprep.subr.mxu0 0.0
        %844 = vmatpush2.msra.mxu0 0.0
        %845 = vmatprep.subr.mxu0 0.0
        %846 = vmatpush2.msra.mxu0 0.0
        %847 = vmatprep.subr.mxu0 0.0
        %848 = vmatpush2.msra.mxu0 0.0
        %849 = vmatprep.subr.mxu0 0.0
        %850 = vmatpush2.msra.mxu0 0.0
        %851 = vmatprep.subr.mxu0 0.0
        %852 = vmatpush2.msra.mxu0 0.0
        %853 = vmatprep.mubr.f32.mxu0 0.0
        %854 = vmatmul.mubr.f32.gmra.mxu0 %v787
        %v855 = vpop.f32.mrf.mxu0
        %v856 = vadd.f32 0.0, %v855
        %v857 = vpop.f32.mrf.mxu0
        %858 = vdwg.mxu0
        %v859 = vadd.f32 %v782, %v856
        %v860 = vxor.u32 %v859, 2147483648
        %v861 = vmul.f32 %v860, 1.442695
        %v862 = vpow.pop %v861
        %v863 = vadd.f32 %v862, 1.0
        %v864 = vrcp.pop %v863
        %v865 = vmul.f32 1.0, %v864
        %v866 = vtanh.pop %v859
        %v867 = vmul.f32 %v865, %v768
        %869 = vrot.lane.b32.xlu0 %v866, 64
        %v870 = vpop.permute.xlu0 %869
        %v872 = vmul.f32 %v865, %v870
        %874 = vrot.lane.b32.xlu0 %v872, 32
        %v875 = vpop.permute.xlu0 %874
        %v877 = vadd.f32 %v867, %v875
        %v878 = vtanh.pop %v877
        %880 = vrot.lane.b32.xlu0 %v878, 64
        %v881 = vpop.permute.xlu0 %880
        %v883 = vmul.f32 %v865, %v881
        %885 = vrot.lane.b32.xlu0 %v883, 32
        %v886 = vpop.permute.xlu0 %885
        %s888 = scalar_lea.vmem [#allocation3], 6
        %889 = vst.msk [vmem:[%s888] sm:$0x3] %vm561, %v886
        %890 = vst.msk [vmem:[#allocation4] sm:$0x3] %vm561, %v886
        %892 = vrot.lane.b32.xlu0 %v877, 96
        %v893 = vpop.permute.xlu0 %892
        %895 = vst.msk [vmem:[#allocation5] sm:$0x3] %vm561, %v893
        %v896 = vld [vmem:[#allocation3] sm:$0xff]
        %v897 = vld [vmem:[#allocation14] sm:$0xff]
        %v898 = vld [vmem:[#allocation14 + $0x8] sm:$0xff]
        %v899 = vld [vmem:[#allocation14 + $0x10] sm:$0xff]
        %v900 = vld [vmem:[#allocation14 + $0x18] sm:$0xff]
        %v901 = vld [vmem:[%s6] sm:$0x1]
        %v903 = vlaneseq
        %v904 = vshrl.u32 %v903, 7
        %v905 = vsub.s32 0, %v904
        %v906 = vrot.slane %v901, %v905
        %v909 = vsel %vm373, %v896, 0
        %911 = vmatprep.subr.mxu0 0.0
        %912 = vmatpush1.msra.mxu0 0.0
        %913 = vmatprep.subr.mxu0 0.0
        %914 = vmatpush1.msra.mxu0 0.0
        %915 = vmatprep.subr.mxu0 0.0
        %916 = vmatpush1.msra.mxu0 0.0
        %917 = vmatprep.subr.mxu0 0.0
        %918 = vmatpush1.msra.mxu0 0.0
        %919 = vmatprep.subr.mxu0 0.0
        %920 = vmatpush1.msra.mxu0 0.0
        %921 = vmatprep.subr.mxu0 0.0
        %922 = vmatpush1.msra.mxu0 0.0
        %923 = vmatprep.subr.mxu0 0.0
        %924 = vmatpush1.msra.mxu0 0.0
        %925 = vmatprep.subr.mxu0 0.0
        %926 = vmatpush1.msra.mxu0 0.0
        %927 = vmatprep.subr.mxu0 0.0
        %928 = vmatpush1.msra.mxu0 0.0
        %929 = vmatprep.subr.mxu0 0.0
        %930 = vmatpush1.msra.mxu0 0.0
        %931 = vmatprep.subr.mxu0 0.0
        %932 = vmatpush1.msra.mxu0 0.0
        %933 = vmatprep.subr.mxu0 0.0
        %934 = vmatpush1.msra.mxu0 0.0
        %935 = vmatprep.subr.mxu0 0.0
        %936 = vmatpush1.msra.mxu0 %v900
        %937 = vmatprep.subr.mxu0 0.0
        %938 = vmatpush1.msra.mxu0 %v899
        %939 = vmatprep.subr.mxu0 0.0
        %940 = vmatpush1.msra.mxu0 %v898
        %941 = vmatprep.subr.mxu0 0.0
        %942 = vmatpush1.msra.mxu0 %v897
        %943 = vmatprep.subr.mxu0 0.0
        %944 = vmatpush2.msra.mxu0 0.0
        %945 = vmatprep.subr.mxu0 0.0
        %946 = vmatpush2.msra.mxu0 0.0
        %947 = vmatprep.subr.mxu0 0.0
        %948 = vmatpush2.msra.mxu0 0.0
        %949 = vmatprep.subr.mxu0 0.0
        %950 = vmatpush2.msra.mxu0 0.0
        %951 = vmatprep.subr.mxu0 0.0
        %952 = vmatpush2.msra.mxu0 0.0
        %953 = vmatprep.subr.mxu0 0.0
        %954 = vmatpush2.msra.mxu0 0.0
        %955 = vmatprep.subr.mxu0 0.0
        %956 = vmatpush2.msra.mxu0 0.0
        %957 = vmatprep.subr.mxu0 0.0
        %958 = vmatpush2.msra.mxu0 0.0
        %959 = vmatprep.subr.mxu0 0.0
        %960 = vmatpush2.msra.mxu0 0.0
        %961 = vmatprep.subr.mxu0 0.0
        %962 = vmatpush2.msra.mxu0 0.0
        %963 = vmatprep.subr.mxu0 0.0
        %964 = vmatpush2.msra.mxu0 0.0
        %965 = vmatprep.subr.mxu0 0.0
        %966 = vmatpush2.msra.mxu0 0.0
        %967 = vmatprep.subr.mxu0 0.0
        %968 = vmatpush2.msra.mxu0 0.0
        %969 = vmatprep.subr.mxu0 0.0
        %970 = vmatpush2.msra.mxu0 0.0
        %971 = vmatprep.subr.mxu0 0.0
        %972 = vmatpush2.msra.mxu0 0.0
        %973 = vmatprep.subr.mxu0 0.0
        %974 = vmatpush2.msra.mxu0 0.0
        %975 = vmatprep.mubr.f32.mxu0 0.0
        %976 = vmatmul.mubr.f32.gmra.mxu0 %v909
        %v977 = vpop.f32.mrf.mxu0
        %v978 = vadd.f32 %v906, %v977
        %v979 = vpop.f32.mrf.mxu0
        %980 = vdwg.mxu0
        %981 = vst [vmem:[#allocation2] sm:$0xff] %v978
        %v982 = vld [vmem:[#allocation6] sm:$0x3]
        %v983 = vld [vmem:[#allocation7] sm:$0x3]
        %v984 = vld [vmem:[#allocation2] sm:$0x3]
        %v985 = vld [vmem:[#allocation16] sm:$0xff]
        %v986 = vld [vmem:[#allocation16 + $0x8] sm:$0xff]
        %v987 = vld [vmem:[#allocation16 + $0x10] sm:$0xff]
        %v988 = vld [vmem:[#allocation16 + $0x18] sm:$0xff]
        %v990 = vsel %vm373, %v982, 0
        %992 = vmatprep.subr.mxu0 0.0
        %993 = vmatpush1.msra.mxu0 0.0
        %994 = vmatprep.subr.mxu0 0.0
        %995 = vmatpush1.msra.mxu0 0.0
        %996 = vmatprep.subr.mxu0 0.0
        %997 = vmatpush1.msra.mxu0 0.0
        %998 = vmatprep.subr.mxu0 0.0
        %999 = vmatpush1.msra.mxu0 0.0
        %1000 = vmatprep.subr.mxu0 0.0
        %1001 = vmatpush1.msra.mxu0 0.0
        %1002 = vmatprep.subr.mxu0 0.0
        %1003 = vmatpush1.msra.mxu0 0.0
        %1004 = vmatprep.subr.mxu0 0.0
        %1005 = vmatpush1.msra.mxu0 0.0
        %1006 = vmatprep.subr.mxu0 0.0
        %1007 = vmatpush1.msra.mxu0 0.0
        %1008 = vmatprep.subr.mxu0 0.0
        %1009 = vmatpush1.msra.mxu0 0.0
        %1010 = vmatprep.subr.mxu0 0.0
        %1011 = vmatpush1.msra.mxu0 0.0
        %1012 = vmatprep.subr.mxu0 0.0
        %1013 = vmatpush1.msra.mxu0 0.0
        %1014 = vmatprep.subr.mxu0 0.0
        %1015 = vmatpush1.msra.mxu0 0.0
        %1016 = vmatprep.subr.mxu0 0.0
        %1017 = vmatpush1.msra.mxu0 %v988
        %1018 = vmatprep.subr.mxu0 0.0
        %1019 = vmatpush1.msra.mxu0 %v987
        %1020 = vmatprep.subr.mxu0 0.0
        %1021 = vmatpush1.msra.mxu0 %v986
        %1022 = vmatprep.subr.mxu0 0.0
        %1023 = vmatpush1.msra.mxu0 %v985
        %1024 = vmatprep.subr.mxu0 0.0
        %1025 = vmatpush2.msra.mxu0 0.0
        %1026 = vmatprep.subr.mxu0 0.0
        %1027 = vmatpush2.msra.mxu0 0.0
        %1028 = vmatprep.subr.mxu0 0.0
        %1029 = vmatpush2.msra.mxu0 0.0
        %1030 = vmatprep.subr.mxu0 0.0
        %1031 = vmatpush2.msra.mxu0 0.0
        %1032 = vmatprep.subr.mxu0 0.0
        %1033 = vmatpush2.msra.mxu0 0.0
        %1034 = vmatprep.subr.mxu0 0.0
        %1035 = vmatpush2.msra.mxu0 0.0
        %1036 = vmatprep.subr.mxu0 0.0
        %1037 = vmatpush2.msra.mxu0 0.0
        %1038 = vmatprep.subr.mxu0 0.0
        %1039 = vmatpush2.msra.mxu0 0.0
        %1040 = vmatprep.subr.mxu0 0.0
        %1041 = vmatpush2.msra.mxu0 0.0
        %1042 = vmatprep.subr.mxu0 0.0
        %1043 = vmatpush2.msra.mxu0 0.0
        %1044 = vmatprep.subr.mxu0 0.0
        %1045 = vmatpush2.msra.mxu0 0.0
        %1046 = vmatprep.subr.mxu0 0.0
        %1047 = vmatpush2.msra.mxu0 0.0
        %1048 = vmatprep.subr.mxu0 0.0
        %1049 = vmatpush2.msra.mxu0 0.0
        %1050 = vmatprep.subr.mxu0 0.0
        %1051 = vmatpush2.msra.mxu0 0.0
        %1052 = vmatprep.subr.mxu0 0.0
        %1053 = vmatpush2.msra.mxu0 0.0
        %1054 = vmatprep.subr.mxu0 0.0
        %1055 = vmatpush2.msra.mxu0 0.0
        %1056 = vmatprep.mubr.f32.mxu0 0.0
        %1057 = vmatmul.mubr.f32.gmra.mxu0 %v990
        %v1058 = vpop.f32.mrf.mxu0
        %v1059 = vadd.f32 0.0, %v1058
        %v1060 = vpop.f32.mrf.mxu0
        %1061 = vdwg.mxu0
        %v1062 = vadd.f32 %v984, %v1059
        %v1063 = vxor.u32 %v1062, 2147483648
        %v1064 = vmul.f32 %v1063, 1.442695
        %v1065 = vpow.pop %v1064
        %v1066 = vadd.f32 %v1065, 1.0
        %v1067 = vrcp.pop %v1066
        %v1068 = vmul.f32 1.0, %v1067
        %v1069 = vtanh.pop %v1062
        %1071 = vrot.lane.b32.xlu0 %v983, 32
        %v1072 = vpop.permute.xlu0 %1071
        %v1074 = vmul.f32 %v1068, %v1072
        %1076 = vrot.lane.b32.xlu0 %v1069, 64
        %v1077 = vpop.permute.xlu0 %1076
        %v1079 = vmul.f32 %v1068, %v1077
        %1081 = vrot.lane.b32.xlu0 %v1079, 32
        %v1082 = vpop.permute.xlu0 %1081
        %v1084 = vadd.f32 %v1074, %v1082
        %v1085 = vtanh.pop %v1084
        %1087 = vrot.lane.b32.xlu0 %v1085, 64
        %v1088 = vpop.permute.xlu0 %1087
        %v1090 = vmul.f32 %v1068, %v1088
        %1092 = vrot.lane.b32.xlu0 %v1090, 32
        %v1093 = vpop.permute.xlu0 %1092
        %1095 = vst.msk [vmem:[%s351] sm:$0x3] %vm561, %v1093
        %v1096 = vld [vmem:[%s563] sm:$0x3]
        %v1097 = vld [vmem:[#allocation16] sm:$0xff]
        %v1098 = vld [vmem:[#allocation16 + $0x8] sm:$0xff]
        %v1099 = vld [vmem:[#allocation16 + $0x10] sm:$0xff]
        %v1100 = vld [vmem:[#allocation16 + $0x18] sm:$0xff]
        %v1101 = vsel %vm373, %v1093, 0
        %1103 = vmatprep.subr.mxu0 0.0
        %1104 = vmatpush1.msra.mxu0 0.0
        %1105 = vmatprep.subr.mxu0 0.0
        %1106 = vmatpush1.msra.mxu0 0.0
        %1107 = vmatprep.subr.mxu0 0.0
        %1108 = vmatpush1.msra.mxu0 0.0
        %1109 = vmatprep.subr.mxu0 0.0
        %1110 = vmatpush1.msra.mxu0 0.0
        %1111 = vmatprep.subr.mxu0 0.0
        %1112 = vmatpush1.msra.mxu0 0.0
        %1113 = vmatprep.subr.mxu0 0.0
        %1114 = vmatpush1.msra.mxu0 0.0
        %1115 = vmatprep.subr.mxu0 0.0
        %1116 = vmatpush1.msra.mxu0 0.0
        %1117 = vmatprep.subr.mxu0 0.0
        %1118 = vmatpush1.msra.mxu0 0.0
        %1119 = vmatprep.subr.mxu0 0.0
        %1120 = vmatpush1.msra.mxu0 0.0
        %1121 = vmatprep.subr.mxu0 0.0
        %1122 = vmatpush1.msra.mxu0 0.0
        %1123 = vmatprep.subr.mxu0 0.0
        %1124 = vmatpush1.msra.mxu0 0.0
        %1125 = vmatprep.subr.mxu0 0.0
        %1126 = vmatpush1.msra.mxu0 0.0
        %1127 = vmatprep.subr.mxu0 0.0
        %1128 = vmatpush1.msra.mxu0 %v1100
        %1129 = vmatprep.subr.mxu0 0.0
        %1130 = vmatpush1.msra.mxu0 %v1099
        %1131 = vmatprep.subr.mxu0 0.0
        %1132 = vmatpush1.msra.mxu0 %v1098
        %1133 = vmatprep.subr.mxu0 0.0
        %1134 = vmatpush1.msra.mxu0 %v1097
        %1135 = vmatprep.subr.mxu0 0.0
        %1136 = vmatpush2.msra.mxu0 0.0
        %1137 = vmatprep.subr.mxu0 0.0
        %1138 = vmatpush2.msra.mxu0 0.0
        %1139 = vmatprep.subr.mxu0 0.0
        %1140 = vmatpush2.msra.mxu0 0.0
        %1141 = vmatprep.subr.mxu0 0.0
        %1142 = vmatpush2.msra.mxu0 0.0
        %1143 = vmatprep.subr.mxu0 0.0
        %1144 = vmatpush2.msra.mxu0 0.0
        %1145 = vmatprep.subr.mxu0 0.0
        %1146 = vmatpush2.msra.mxu0 0.0
        %1147 = vmatprep.subr.mxu0 0.0
        %1148 = vmatpush2.msra.mxu0 0.0
        %1149 = vmatprep.subr.mxu0 0.0
        %1150 = vmatpush2.msra.mxu0 0.0
        %1151 = vmatprep.subr.mxu0 0.0
        %1152 = vmatpush2.msra.mxu0 0.0
        %1153 = vmatprep.subr.mxu0 0.0
        %1154 = vmatpush2.msra.mxu0 0.0
        %1155 = vmatprep.subr.mxu0 0.0
        %1156 = vmatpush2.msra.mxu0 0.0
        %1157 = vmatprep.subr.mxu0 0.0
        %1158 = vmatpush2.msra.mxu0 0.0
        %1159 = vmatprep.subr.mxu0 0.0
        %1160 = vmatpush2.msra.mxu0 0.0
        %1161 = vmatprep.subr.mxu0 0.0
        %1162 = vmatpush2.msra.mxu0 0.0
        %1163 = vmatprep.subr.mxu0 0.0
        %1164 = vmatpush2.msra.mxu0 0.0
        %1165 = vmatprep.subr.mxu0 0.0
        %1166 = vmatpush2.msra.mxu0 0.0
        %1167 = vmatprep.mubr.f32.mxu0 0.0
        %1168 = vmatmul.mubr.f32.gmra.mxu0 %v1101
        %v1169 = vpop.f32.mrf.mxu0
        %v1170 = vadd.f32 0.0, %v1169
        %v1171 = vpop.f32.mrf.mxu0
        %1172 = vdwg.mxu0
        %v1173 = vadd.f32 %v1096, %v1170
        %v1174 = vxor.u32 %v1173, 2147483648
        %v1175 = vmul.f32 %v1174, 1.442695
        %v1176 = vpow.pop %v1175
        %v1177 = vadd.f32 %v1176, 1.0
        %v1178 = vrcp.pop %v1177
        %v1179 = vmul.f32 1.0, %v1178
        %v1180 = vtanh.pop %v1173
        %v1181 = vmul.f32 %v1179, %v1084
        %1183 = vrot.lane.b32.xlu0 %v1180, 64
        %v1184 = vpop.permute.xlu0 %1183
        %v1186 = vmul.f32 %v1179, %v1184
        %1188 = vrot.lane.b32.xlu0 %v1186, 32
        %v1189 = vpop.permute.xlu0 %1188
        %v1191 = vadd.f32 %v1181, %v1189
        %v1192 = vtanh.pop %v1191
        %1194 = vrot.lane.b32.xlu0 %v1192, 64
        %v1195 = vpop.permute.xlu0 %1194
        %v1197 = vmul.f32 %v1179, %v1195
        %1199 = vrot.lane.b32.xlu0 %v1197, 32
        %v1200 = vpop.permute.xlu0 %1199
        %s1202 = scalar_lea.vmem %s351, 2 [#allocation17]
        %1203 = vst.msk [vmem:[%s1202] sm:$0x3] %vm561, %v1200
        %v1204 = vld [vmem:[%s672] sm:$0x3]
        %v1205 = vld [vmem:[#allocation16] sm:$0xff]
        %v1206 = vld [vmem:[#allocation16 + $0x8] sm:$0xff]
        %v1207 = vld [vmem:[#allocation16 + $0x10] sm:$0xff]
        %v1208 = vld [vmem:[#allocation16 + $0x18] sm:$0xff]
        %v1209 = vsel %vm373, %v1200, 0
        %1211 = vmatprep.subr.mxu0 0.0
        %1212 = vmatpush1.msra.mxu0 0.0
        %1213 = vmatprep.subr.mxu0 0.0
        %1214 = vmatpush1.msra.mxu0 0.0
        %1215 = vmatprep.subr.mxu0 0.0
        %1216 = vmatpush1.msra.mxu0 0.0
        %1217 = vmatprep.subr.mxu0 0.0
        %1218 = vmatpush1.msra.mxu0 0.0
        %1219 = vmatprep.subr.mxu0 0.0
        %1220 = vmatpush1.msra.mxu0 0.0
        %1221 = vmatprep.subr.mxu0 0.0
        %1222 = vmatpush1.msra.mxu0 0.0
        %1223 = vmatprep.subr.mxu0 0.0
        %1224 = vmatpush1.msra.mxu0 0.0
        %1225 = vmatprep.subr.mxu0 0.0
        %1226 = vmatpush1.msra.mxu0 0.0
        %1227 = vmatprep.subr.mxu0 0.0
        %1228 = vmatpush1.msra.mxu0 0.0
        %1229 = vmatprep.subr.mxu0 0.0
        %1230 = vmatpush1.msra.mxu0 0.0
        %1231 = vmatprep.subr.mxu0 0.0
        %1232 = vmatpush1.msra.mxu0 0.0
        %1233 = vmatprep.subr.mxu0 0.0
        %1234 = vmatpush1.msra.mxu0 0.0
        %1235 = vmatprep.subr.mxu0 0.0
        %1236 = vmatpush1.msra.mxu0 %v1208
        %1237 = vmatprep.subr.mxu0 0.0
        %1238 = vmatpush1.msra.mxu0 %v1207
        %1239 = vmatprep.subr.mxu0 0.0
        %1240 = vmatpush1.msra.mxu0 %v1206
        %1241 = vmatprep.subr.mxu0 0.0
        %1242 = vmatpush1.msra.mxu0 %v1205
        %1243 = vmatprep.subr.mxu0 0.0
        %1244 = vmatpush2.msra.mxu0 0.0
        %1245 = vmatprep.subr.mxu0 0.0
        %1246 = vmatpush2.msra.mxu0 0.0
        %1247 = vmatprep.subr.mxu0 0.0
        %1248 = vmatpush2.msra.mxu0 0.0
        %1249 = vmatprep.subr.mxu0 0.0
        %1250 = vmatpush2.msra.mxu0 0.0
        %1251 = vmatprep.subr.mxu0 0.0
        %1252 = vmatpush2.msra.mxu0 0.0
        %1253 = vmatprep.subr.mxu0 0.0
        %1254 = vmatpush2.msra.mxu0 0.0
        %1255 = vmatprep.subr.mxu0 0.0
        %1256 = vmatpush2.msra.mxu0 0.0
        %1257 = vmatprep.subr.mxu0 0.0
        %1258 = vmatpush2.msra.mxu0 0.0
        %1259 = vmatprep.subr.mxu0 0.0
        %1260 = vmatpush2.msra.mxu0 0.0
        %1261 = vmatprep.subr.mxu0 0.0
        %1262 = vmatpush2.msra.mxu0 0.0
        %1263 = vmatprep.subr.mxu0 0.0
        %1264 = vmatpush2.msra.mxu0 0.0
        %1265 = vmatprep.subr.mxu0 0.0
        %1266 = vmatpush2.msra.mxu0 0.0
        %1267 = vmatprep.subr.mxu0 0.0
        %1268 = vmatpush2.msra.mxu0 0.0
        %1269 = vmatprep.subr.mxu0 0.0
        %1270 = vmatpush2.msra.mxu0 0.0
        %1271 = vmatprep.subr.mxu0 0.0
        %1272 = vmatpush2.msra.mxu0 0.0
        %1273 = vmatprep.subr.mxu0 0.0
        %1274 = vmatpush2.msra.mxu0 0.0
        %1275 = vmatprep.mubr.f32.mxu0 0.0
        %1276 = vmatmul.mubr.f32.gmra.mxu0 %v1209
        %v1277 = vpop.f32.mrf.mxu0
        %v1278 = vadd.f32 0.0, %v1277
        %v1279 = vpop.f32.mrf.mxu0
        %1280 = vdwg.mxu0
        %v1281 = vadd.f32 %v1204, %v1278
        %v1282 = vxor.u32 %v1281, 2147483648
        %v1283 = vmul.f32 %v1282, 1.442695
        %v1284 = vpow.pop %v1283
        %v1285 = vadd.f32 %v1284, 1.0
        %v1286 = vrcp.pop %v1285
        %v1287 = vmul.f32 1.0, %v1286
        %v1288 = vtanh.pop %v1281
        %v1289 = vmul.f32 %v1287, %v1191
        %1291 = vrot.lane.b32.xlu0 %v1288, 64
        %v1292 = vpop.permute.xlu0 %1291
        %v1294 = vmul.f32 %v1287, %v1292
        %1296 = vrot.lane.b32.xlu0 %v1294, 32
        %v1297 = vpop.permute.xlu0 %1296
        %v1299 = vadd.f32 %v1289, %v1297
        %v1300 = vtanh.pop %v1299
        %1302 = vrot.lane.b32.xlu0 %v1300, 64
        %v1303 = vpop.permute.xlu0 %1302
        %v1305 = vmul.f32 %v1287, %v1303
        %1307 = vrot.lane.b32.xlu0 %v1305, 32
        %v1308 = vpop.permute.xlu0 %1307
        %s1310 = scalar_lea.vmem %s351, 4 [#allocation17]
        %1311 = vst.msk [vmem:[%s1310] sm:$0x3] %vm561, %v1308
        %v1312 = vld [vmem:[%s781] sm:$0x3]
        %v1313 = vld [vmem:[#allocation16] sm:$0xff]
        %v1314 = vld [vmem:[#allocation16 + $0x8] sm:$0xff]
        %v1315 = vld [vmem:[#allocation16 + $0x10] sm:$0xff]
        %v1316 = vld [vmem:[#allocation16 + $0x18] sm:$0xff]
        %v1317 = vsel %vm373, %v1308, 0
        %1319 = vmatprep.subr.mxu0 0.0
        %1320 = vmatpush1.msra.mxu0 0.0
        %1321 = vmatprep.subr.mxu0 0.0
        %1322 = vmatpush1.msra.mxu0 0.0
        %1323 = vmatprep.subr.mxu0 0.0
        %1324 = vmatpush1.msra.mxu0 0.0
        %1325 = vmatprep.subr.mxu0 0.0
        %1326 = vmatpush1.msra.mxu0 0.0
        %1327 = vmatprep.subr.mxu0 0.0
        %1328 = vmatpush1.msra.mxu0 0.0
        %1329 = vmatprep.subr.mxu0 0.0
        %1330 = vmatpush1.msra.mxu0 0.0
        %1331 = vmatprep.subr.mxu0 0.0
        %1332 = vmatpush1.msra.mxu0 0.0
        %1333 = vmatprep.subr.mxu0 0.0
        %1334 = vmatpush1.msra.mxu0 0.0
        %1335 = vmatprep.subr.mxu0 0.0
        %1336 = vmatpush1.msra.mxu0 0.0
        %1337 = vmatprep.subr.mxu0 0.0
        %1338 = vmatpush1.msra.mxu0 0.0
        %1339 = vmatprep.subr.mxu0 0.0
        %1340 = vmatpush1.msra.mxu0 0.0
        %1341 = vmatprep.subr.mxu0 0.0
        %1342 = vmatpush1.msra.mxu0 0.0
        %1343 = vmatprep.subr.mxu0 0.0
        %1344 = vmatpush1.msra.mxu0 %v1316
        %1345 = vmatprep.subr.mxu0 0.0
        %1346 = vmatpush1.msra.mxu0 %v1315
        %1347 = vmatprep.subr.mxu0 0.0
        %1348 = vmatpush1.msra.mxu0 %v1314
        %1349 = vmatprep.subr.mxu0 0.0
        %1350 = vmatpush1.msra.mxu0 %v1313
        %1351 = vmatprep.subr.mxu0 0.0
        %1352 = vmatpush2.msra.mxu0 0.0
        %1353 = vmatprep.subr.mxu0 0.0
        %1354 = vmatpush2.msra.mxu0 0.0
        %1355 = vmatprep.subr.mxu0 0.0
        %1356 = vmatpush2.msra.mxu0 0.0
        %1357 = vmatprep.subr.mxu0 0.0
        %1358 = vmatpush2.msra.mxu0 0.0
        %1359 = vmatprep.subr.mxu0 0.0
        %1360 = vmatpush2.msra.mxu0 0.0
        %1361 = vmatprep.subr.mxu0 0.0
        %1362 = vmatpush2.msra.mxu0 0.0
        %1363 = vmatprep.subr.mxu0 0.0
        %1364 = vmatpush2.msra.mxu0 0.0
        %1365 = vmatprep.subr.mxu0 0.0
        %1366 = vmatpush2.msra.mxu0 0.0
        %1367 = vmatprep.subr.mxu0 0.0
        %1368 = vmatpush2.msra.mxu0 0.0
        %1369 = vmatprep.subr.mxu0 0.0
        %1370 = vmatpush2.msra.mxu0 0.0
        %1371 = vmatprep.subr.mxu0 0.0
        %1372 = vmatpush2.msra.mxu0 0.0
        %1373 = vmatprep.subr.mxu0 0.0
        %1374 = vmatpush2.msra.mxu0 0.0
        %1375 = vmatprep.subr.mxu0 0.0
        %1376 = vmatpush2.msra.mxu0 0.0
        %1377 = vmatprep.subr.mxu0 0.0
        %1378 = vmatpush2.msra.mxu0 0.0
        %1379 = vmatprep.subr.mxu0 0.0
        %1380 = vmatpush2.msra.mxu0 0.0
        %1381 = vmatprep.subr.mxu0 0.0
        %1382 = vmatpush2.msra.mxu0 0.0
        %1383 = vmatprep.mubr.f32.mxu0 0.0
        %1384 = vmatmul.mubr.f32.gmra.mxu0 %v1317
        %v1385 = vpop.f32.mrf.mxu0
        %v1386 = vadd.f32 0.0, %v1385
        %v1387 = vpop.f32.mrf.mxu0
        %1388 = vdwg.mxu0
        %v1389 = vadd.f32 %v1312, %v1386
        %v1390 = vxor.u32 %v1389, 2147483648
        %v1391 = vmul.f32 %v1390, 1.442695
        %v1392 = vpow.pop %v1391
        %v1393 = vadd.f32 %v1392, 1.0
        %v1394 = vrcp.pop %v1393
        %v1395 = vmul.f32 1.0, %v1394
        %v1396 = vtanh.pop %v1389
        %v1397 = vmul.f32 %v1395, %v1299
        %1399 = vrot.lane.b32.xlu0 %v1396, 64
        %v1400 = vpop.permute.xlu0 %1399
        %v1402 = vmul.f32 %v1395, %v1400
        %1404 = vrot.lane.b32.xlu0 %v1402, 32
        %v1405 = vpop.permute.xlu0 %1404
        %v1407 = vadd.f32 %v1397, %v1405
        %v1408 = vtanh.pop %v1407
        %1410 = vrot.lane.b32.xlu0 %v1408, 64
        %v1411 = vpop.permute.xlu0 %1410
        %v1413 = vmul.f32 %v1395, %v1411
        %1415 = vrot.lane.b32.xlu0 %v1413, 32
        %v1416 = vpop.permute.xlu0 %1415
        %s1418 = scalar_lea.vmem %s351, 6 [#allocation17]
        %1419 = vst.msk [vmem:[%s1418] sm:$0x3] %vm561, %v1416
        %1420 = vst.msk [vmem:[#allocation6] sm:$0x3] %vm561, %v1416
        %1422 = vrot.lane.b32.xlu0 %v1407, 96
        %v1423 = vpop.permute.xlu0 %1422
        %1425 = vst.msk [vmem:[#allocation7] sm:$0x3] %vm561, %v1423
        %s1426 = sand.u32 %s186, 1
        %s1427 = scalar_lea.sflag [#allocation10], %s1426
        %s1428 = sand.u32 %s186, 1
        %s1429 = smul.addr %s1428, 8
        %s1430 = scalar_lea.vmem [#allocation17], %s1429
        // Predicated region
        $region73: #{tpu_custom_call.1} parent=47 // pred_check
          %p1431 = pneg %p196
        $region74: #{tpu_custom_call.1} parent=47 // pred_check_branch
          %1433 = sbr.rel (%p1431) target = $region76
        $region75: #{tpu_custom_call.1} parent=47 // pred_region
          %s1435 = ssub.s32 128, 128
          %1436 = vsyncadd %s1427, %s1435
          %s1437 = smul.addr %s26, 128
          %s1438 = scalar_lea.hbm %s7, %s1437
          %s1440 = sshll.u32 %s1430, 4
          %s1441 = int_to_ptr.vmem [resolvable:$true] %s1440
          %1443 = dma.vmem_to_hbm [thread:$0]  %s1441, 128, %s1438, %s1427
        $region76: #{tpu_custom_call.1} parent=47 // pred_fallthru
          _
      $region48: #{tpu_custom_call.1} parent=5 // pred_fallthru
        _
      %p1444 = scmp.le.s32.totalorder 2, %s21
      // Predicated region
      $region77: #{tpu_custom_call.1} parent=5 // pred_check
        %p1445 = pneg %p1444
      $region78: #{tpu_custom_call.1} parent=5 // pred_check_branch
        %1447 = sbr.rel (%p1445) target = $region80
      $region79: #{tpu_custom_call.1} parent=5 // pred_region
        %s1448 = ssub.s32 %s21, 2
        // Predicated region
        $region81: #{tpu_custom_call.1} parent=79 // pred_check
          %p1449 = pneg %p202
        $region82: #{tpu_custom_call.1} parent=79 // pred_check_branch
          %1451 = sbr.rel (%p1449) target = $region84
        $region83: #{tpu_custom_call.1} parent=79 // pred_region
          %s1452 = sand.u32 %s187, 1
          %s1453 = scalar_lea.sflag [#allocation10], %s1452
          %s1454 = sand.u32 %s187, 1
          %s1455 = smul.addr %s1454, 8
          %s1456 = scalar_lea.vmem [#allocation17], %s1455
          %1457 = dma.done %s1453, 128
        $region84: #{tpu_custom_call.1} parent=79 // pred_fallthru
          _
      $region80: #{tpu_custom_call.1} parent=5 // pred_fallthru
        _
    $region6: #{tpu_custom_call.1} parent=1 // loop_footer
      %s25 = sadd.s32 1, %s21
    $region7: #{tpu_custom_call.1} parent=1 // loop_footer_branch
      %20 = sbr.rel target = $region3
    $region8: #{tpu_custom_call.1} parent=1 // loop_exit
      _
    %1458 = vsyncpa [#allocation9], 1
    %s1459 = scalar_lea.sflag [#allocation9], 1
    %1460 = vsyncpa %s1459, 1
    %1461 = vsyncpa [#allocation12], 1
    %1462 = vsyncpa [#allocation15], 1
    %1463 = vsyncpa [#allocation10], 1
    %s1464 = scalar_lea.sflag [#allocation10], 1
    %1465 = vsyncpa %s1464, 1

</llo_original>
